<compile_context>
chip_gen: v6e
topology: v6e:2x2x1
jax: 0.10.0
libtpu: 0.0.40
codegen_flags: <defaults>
</compile_context>

<pallas_src>
import functools

import jax
import jax.numpy as jnp
from jax.experimental import pallas as pl
from jax.experimental.pallas import tpu as pltpu

# Matches the PyTorch module: BatchNorm2d(2304, eps=0.001, ...)
EPS = 1e-3

# Conservative padded-working-set budget (fits v5e's 16 MiB scoped default).
_VMEM_BUDGET_BYTES = 12 * 1024 * 1024


def _bn_kernel(x_ref, gamma_ref, beta_ref, o_ref):
    # x_ref: (M, TC) tile, M = N*H*W rows (sublanes), TC channels (lanes).
    # gamma_ref / beta_ref: (1, TC) affine params for this channel tile.
    x = x_ref[...].astype(jnp.float32)
    m = x.shape[0]
    inv_m = 1.0 / m

    # Per-channel batch mean over the full N*H*W extent (resident in this block).
    mean = jnp.sum(x, axis=0, keepdims=True) * inv_m          # (1, TC)
    # Two-pass (centered) biased variance: numerically safe, tile is in VMEM.
    centered = x - mean
    var = jnp.sum(centered * centered, axis=0, keepdims=True) * inv_m

    inv_std = jax.lax.rsqrt(var + EPS)                         # (1, TC)
    scale = inv_std * gamma_ref[...].astype(jnp.float32)       # (1, TC)
    o_ref[...] = (centered * scale
                  + beta_ref[...].astype(jnp.float32)).astype(o_ref.dtype)


def _padded_block_bytes(m, tile_c, itemsize):
    # Sublane-pad the row count to a multiple of 8; tile_c is lane-dense.
    m_pad = ((m + 7) // 8) * 8
    act = m_pad * tile_c * itemsize        # one activation buffer
    par = 8 * tile_c * 4                   # one (1, tile_c) f32 param buffer (padded)
    # input + output, double-buffered, plus 2 params double-buffered.
    return 4 * act + 4 * par


def _pick_tile_c(c, m, itemsize):
    """Prefer a single full-C block (grid=(1,)); otherwise the largest
    128-multiple channel tile dividing C that fits the VMEM budget."""
    if _padded_block_bytes(m, c, itemsize) <= _VMEM_BUDGET_BYTES:
        return c
    if c % 128 != 0:
        raise ValueError(
            f"C={c} too large for one block and not a multiple of 128; "
            "add a spatial/row tiling for this shape")
    tc = (c // 128) * 128
    while tc >= 128:
        if c % tc == 0 and _padded_block_bytes(m, tc, itemsize) <= _VMEM_BUDGET_BYTES:
            return tc
        tc -= 128
    raise ValueError("no feasible channel tile; tile the row axis as well")


@functools.partial(jax.jit, static_argnames=("tile_c",))
def batchnorm2d_pallas(x_nchw, gamma, beta, tile_c=None):
    """Training-mode BatchNorm2d forward. x_nchw: (N, C, H, W); gamma/beta: (C,)."""
    n, c, h, w = x_nchw.shape
    m = n * h * w
    itemsize = jnp.dtype(x_nchw.dtype).itemsize
    if tile_c is None:
        tile_c = _pick_tile_c(c, m, itemsize)
    assert c % tile_c == 0, "channel count must be divisible by the channel tile"
    assert _padded_block_bytes(m, tile_c, itemsize) <= _VMEM_BUDGET_BYTES, (
        "padded working set exceeds VMEM budget; tile the row axis")

    # Channels-last 2D view: rows = N*H*W (sublanes), cols = C (lanes).
    x2d = jnp.transpose(x_nchw, (0, 2, 3, 1)).reshape(m, c)
    g2d = gamma.reshape(1, c).astype(jnp.float32)
    b2d = beta.reshape(1, c).astype(jnp.float32)

    grid = (c // tile_c,)

    out2d = pl.pallas_call(
        _bn_kernel,
        out_shape=jax.ShapeDtypeStruct((m, c), x_nchw.dtype),
        grid_spec=pltpu.PrefetchScalarGridSpec(
            num_scalar_prefetch=0,
            grid=grid,
            in_specs=[
                pl.BlockSpec((m, tile_c), lambda j: (0, j)),
                pl.BlockSpec((1, tile_c), lambda j: (0, j)),
                pl.BlockSpec((1, tile_c), lambda j: (0, j)),
            ],
            out_specs=pl.BlockSpec((m, tile_c), lambda j: (0, j)),
        ),
        compiler_params=pltpu.CompilerParams(
            dimension_semantics=("parallel",),
        ),
    )(x2d, g2d, b2d)

    # Back to NCHW.
    return jnp.transpose(out2d.reshape(n, h, w, c), (0, 3, 1, 2))


def _reference(x_nchw, gamma, beta):
    # Pure-JAX reference of training-mode BatchNorm2d forward (eps=1e-3).
    mean = jnp.mean(x_nchw, axis=(0, 2, 3), keepdims=True)
    var = jnp.mean((x_nchw - mean) ** 2, axis=(0, 2, 3), keepdims=True)
    g = gamma.reshape(1, -1, 1, 1)
    b = beta.reshape(1, -1, 1, 1)
    return (x_nchw - mean) * jax.lax.rsqrt(var + EPS) * g + b


if __name__ == "__main__":
    key = jax.random.PRNGKey(0)
    kx, kg, kb = jax.random.split(key, 3)

    # Shape from the module spec: x595 = torch.randn([1, 2304, 7, 7])
    N, C, H, W = 1, 2304, 7, 7
    x = jax.random.normal(kx, (N, C, H, W), dtype=jnp.float32)
    # PyTorch default affine init is ones/zeros; use non-trivial values to
    # exercise the affine path.
    gamma = 1.0 + 0.1 * jax.random.normal(kg, (C,), dtype=jnp.float32)
    beta = 0.1 * jax.random.normal(kb, (C,), dtype=jnp.float32)

    out = batchnorm2d_pallas(x, gamma, beta)
    out = jax.block_until_ready(out)

    ref = _reference(x, gamma, beta)
    assert out.shape == (N, C, H, W)
    assert jnp.allclose(out, ref, atol=1e-4, rtol=1e-4), "mismatch vs reference"

    print("KERNEL_OK")
</pallas_src>

<mosaic_0001>
module attributes {stable_mosaic.version = 11 : i64} {
  func.func @_bn_kernel(%arg0: i32, %arg1: memref<49x2304xf32, #tpu.memory_space<vmem>>, %arg2: memref<1x2304xf32, #tpu.memory_space<vmem>>, %arg3: memref<1x2304xf32, #tpu.memory_space<vmem>>, %arg4: memref<49x2304xf32, #tpu.memory_space<vmem>>) attributes {dimension_semantics = [#tpu.dimension_semantics<parallel>], iteration_bounds = array<i64: 1>, scalar_prefetch = 0 : i64, scratch_operands = 0 : i64, tpu.core_type = #tpu.core_type<tc>, window_params = [{transform_indices = @transform_0, window_bounds = array<i64: 49, 2304>}, {transform_indices = @transform_1, window_bounds = array<i64: 1, 2304>}, {transform_indices = @transform_2, window_bounds = array<i64: 1, 2304>}, {transform_indices = @transform_3, window_bounds = array<i64: 49, 2304>}]} {
    %c0 = arith.constant 0 : index
    %c0_0 = arith.constant 0 : index
    %0 = vector.load %arg1[%c0, %c0_0] : memref<49x2304xf32, #tpu.memory_space<vmem>>, vector<49x2304xf32>
    %cst = arith.constant dense<0.000000e+00> : vector<2304xf32>
    %1 = vector.multi_reduction <add>, %0, %cst [0] : vector<49x2304xf32> to vector<2304xf32>
    %2 = vector.shape_cast %1 : vector<2304xf32> to vector<1x2304xf32>
    %cst_1 = arith.constant 0.0204081628 : f32
    %3 = vector.broadcast %cst_1 : f32 to vector<1x2304xf32>
    %4 = arith.mulf %2, %3 : vector<1x2304xf32>
    %5 = vector.broadcast %4 : vector<1x2304xf32> to vector<49x2304xf32>
    %6 = arith.subf %0, %5 : vector<49x2304xf32>
    %7 = arith.mulf %6, %6 : vector<49x2304xf32>
    %cst_2 = arith.constant dense<0.000000e+00> : vector<2304xf32>
    %8 = vector.multi_reduction <add>, %7, %cst_2 [0] : vector<49x2304xf32> to vector<2304xf32>
    %9 = vector.shape_cast %8 : vector<2304xf32> to vector<1x2304xf32>
    %cst_3 = arith.constant 0.0204081628 : f32
    %10 = vector.broadcast %cst_3 : f32 to vector<1x2304xf32>
    %11 = arith.mulf %9, %10 : vector<1x2304xf32>
    %cst_4 = arith.constant 1.000000e-03 : f32
    %12 = vector.broadcast %cst_4 : f32 to vector<1x2304xf32>
    %13 = arith.addf %11, %12 : vector<1x2304xf32>
    %14 = math.rsqrt %13 : vector<1x2304xf32>
    %c0_5 = arith.constant 0 : index
    %c0_6 = arith.constant 0 : index
    %15 = vector.load %arg2[%c0_5, %c0_6] : memref<1x2304xf32, #tpu.memory_space<vmem>>, vector<1x2304xf32>
    %16 = arith.mulf %14, %15 : vector<1x2304xf32>
    %17 = vector.broadcast %16 : vector<1x2304xf32> to vector<49x2304xf32>
    %18 = arith.mulf %6, %17 : vector<49x2304xf32>
    %c0_7 = arith.constant 0 : index
    %c0_8 = arith.constant 0 : index
    %19 = vector.load %arg3[%c0_7, %c0_8] : memref<1x2304xf32, #tpu.memory_space<vmem>>, vector<1x2304xf32>
    %20 = vector.broadcast %19 : vector<1x2304xf32> to vector<49x2304xf32>
    %21 = arith.addf %18, %20 : vector<49x2304xf32>
    %c0_9 = arith.constant 0 : index
    %c0_10 = arith.constant 0 : index
    %22 = vector.load %arg4[%c0_9, %c0_10] : memref<49x2304xf32, #tpu.memory_space<vmem>>, vector<49x2304xf32>
    tpu.vector_store %arg4[%c0_9, %c0_10], %21 {strides = array<i32>} : memref<49x2304xf32, #tpu.memory_space<vmem>>, vector<49x2304xf32>,
    return
  }
  func.func @transform_0(%arg0: i32) -> (i32, i32) {
    %c0_i32 = arith.constant 0 : i32
    %c0_i32_0 = arith.constant 0 : i32
    return %c0_i32, %arg0 : i32, i32
  }
  func.func @transform_1(%arg0: i32) -> (i32, i32) {
    %c0_i32 = arith.constant 0 : i32
    %c0_i32_0 = arith.constant 0 : i32
    return %c0_i32, %arg0 : i32, i32
  }
  func.func @transform_2(%arg0: i32) -> (i32, i32) {
    %c0_i32 = arith.constant 0 : i32
    %c0_i32_0 = arith.constant 0 : i32
    return %c0_i32, %arg0 : i32, i32
  }
  func.func @transform_3(%arg0: i32) -> (i32, i32) {
    %c0_i32 = arith.constant 0 : i32
    %c0_i32_0 = arith.constant 0 : i32
    return %c0_i32, %arg0 : i32, i32
  }
}

</mosaic_0001>

<llo_original>
// kernel: batchnorm2d_pallas.1
$region0: #{batchnorm2d_pallas.1}
  #allocation0 [shape = 'u32[]', space=smem, size = 0x4, offset = 0x4, fixed_abs, tag = 'smem constant byte address 0x4 - core index']
  #allocation1 [shape = 'u32[144,128]{1,0:T(1,128)}', space=vmem, size = 0x12000, scoped, tag = 'internal scratch']
  %s0 = inlined_call_operand.vmem [shape: f32[49,2304], index: 0, kind: input, shape index: {}]
  %s1 = inlined_call_operand.vmem [shape: f32[1,2304], index: 1, kind: input, shape index: {}]
  %s2 = inlined_call_operand.vmem [shape: f32[1,2304], index: 2, kind: input, shape index: {}]
  %s3 = inlined_call_operand.vmem [shape: f32[49,2304], index: 3, kind: output, shape index: {}]
  %s4 = sld [smem:[#allocation0]]
  $region22: #{batchnorm2d_pallas.1} parent=0
    _
  %s6 = ssub.s32 1, %s4
  %s7 = scalar_select 0, %s6, %s4
  // Predicated region
  $region2: #{batchnorm2d_pallas.1} parent=0 // pred_check
    _
  $region3: #{batchnorm2d_pallas.1} parent=0 // pred_check_branch
    %9 = sbr.rel (0) target = $region5
  $region4: #{batchnorm2d_pallas.1} parent=0 // pred_region
    _
  $region5: #{batchnorm2d_pallas.1} parent=0 // pred_fallthru
    _
  // Predicated region
  $region6: #{batchnorm2d_pallas.1} parent=0 // pred_check
    _
  $region7: #{batchnorm2d_pallas.1} parent=0 // pred_check_branch
    %11 = sbr.rel (0) target = $region9
  $region8: #{batchnorm2d_pallas.1} parent=0 // pred_region
    _
  $region9: #{batchnorm2d_pallas.1} parent=0 // pred_fallthru
    _
  // Predicated region
  $region10: #{batchnorm2d_pallas.1} parent=0 // pred_check
    _
  $region11: #{batchnorm2d_pallas.1} parent=0 // pred_check_branch
    %13 = sbr.rel (0) target = $region13
  $region12: #{batchnorm2d_pallas.1} parent=0 // pred_region
    _
  $region13: #{batchnorm2d_pallas.1} parent=0 // pred_fallthru
    _
  %v14 = vld [vmem:[%s0] sm:$0xff]
  %v15 = vld [vmem:[%s0 + $0x8] sm:$0xff]
  %v16 = vld [vmem:[%s0 + $0x10] sm:$0xff]
  %v17 = vld [vmem:[%s0 + $0x18] sm:$0xff]
  %v18 = vld [vmem:[%s0 + $0x20] sm:$0xff]
  %v19 = vld [vmem:[%s0 + $0x28] sm:$0xff]
  %v20 = vld [vmem:[%s0 + $0x30] sm:$0xff]
  %v21 = vld [vmem:[%s0 + $0x38] sm:$0xff]
  %v22 = vld [vmem:[%s0 + $0x40] sm:$0xff]
  %v23 = vld [vmem:[%s0 + $0x48] sm:$0xff]
  %v24 = vld [vmem:[%s0 + $0x50] sm:$0xff]
  %v25 = vld [vmem:[%s0 + $0x58] sm:$0xff]
  %v26 = vld [vmem:[%s0 + $0x60] sm:$0xff]
  %v27 = vld [vmem:[%s0 + $0x68] sm:$0xff]
  %v28 = vld [vmem:[%s0 + $0x70] sm:$0xff]
  %v29 = vld [vmem:[%s0 + $0x78] sm:$0xff]
  %v30 = vld [vmem:[%s0 + $0x80] sm:$0xff]
  %v31 = vld [vmem:[%s0 + $0x88] sm:$0xff]
  %v32 = vld [vmem:[%s0 + $0x90] sm:$0xff]
  %v33 = vld [vmem:[%s0 + $0x98] sm:$0xff]
  %v34 = vld [vmem:[%s0 + $0xa0] sm:$0xff]
  %v35 = vld [vmem:[%s0 + $0xa8] sm:$0xff]
  %v36 = vld [vmem:[%s0 + $0xb0] sm:$0xff]
  %v37 = vld [vmem:[%s0 + $0xb8] sm:$0xff]
  %v38 = vld [vmem:[%s0 + $0xc0] sm:$0xff]
  %v39 = vld [vmem:[%s0 + $0xc8] sm:$0xff]
  %v40 = vld [vmem:[%s0 + $0xd0] sm:$0xff]
  %v41 = vld [vmem:[%s0 + $0xd8] sm:$0xff]
  %v42 = vld [vmem:[%s0 + $0xe0] sm:$0xff]
  %v43 = vld [vmem:[%s0 + $0xe8] sm:$0xff]
  %v44 = vld [vmem:[%s0 + $0xf0] sm:$0xff]
  %v45 = vld [vmem:[%s0 + $0xf8] sm:$0xff]
  %v46 = vld [vmem:[%s0 + $0x100] sm:$0xff]
  %v47 = vld [vmem:[%s0 + $0x108] sm:$0xff]
  %v48 = vld [vmem:[%s0 + $0x110] sm:$0xff]
  %v49 = vld [vmem:[%s0 + $0x118] sm:$0xff]
  %v50 = vld [vmem:[%s0 + $0x120] sm:$0xff]
  %v51 = vld [vmem:[%s0 + $0x128] sm:$0xff]
  %v52 = vld [vmem:[%s0 + $0x130] sm:$0xff]
  %v53 = vld [vmem:[%s0 + $0x138] sm:$0xff]
  %v54 = vld [vmem:[%s0 + $0x140] sm:$0xff]
  %v55 = vld [vmem:[%s0 + $0x148] sm:$0xff]
  %v56 = vld [vmem:[%s0 + $0x150] sm:$0xff]
  %v57 = vld [vmem:[%s0 + $0x158] sm:$0xff]
  %v58 = vld [vmem:[%s0 + $0x160] sm:$0xff]
  %v59 = vld [vmem:[%s0 + $0x168] sm:$0xff]
  %v60 = vld [vmem:[%s0 + $0x170] sm:$0xff]
  %v61 = vld [vmem:[%s0 + $0x178] sm:$0xff]
  %v62 = vld [vmem:[%s0 + $0x180] sm:$0xff]
  %v63 = vld [vmem:[%s0 + $0x188] sm:$0xff]
  %v64 = vld [vmem:[%s0 + $0x190] sm:$0xff]
  %v65 = vld [vmem:[%s0 + $0x198] sm:$0xff]
  %v66 = vld [vmem:[%s0 + $0x1a0] sm:$0xff]
  %v67 = vld [vmem:[%s0 + $0x1a8] sm:$0xff]
  %v68 = vld [vmem:[%s0 + $0x1b0] sm:$0xff]
  %v69 = vld [vmem:[%s0 + $0x1b8] sm:$0xff]
  %v70 = vld [vmem:[%s0 + $0x1c0] sm:$0xff]
  %v71 = vld [vmem:[%s0 + $0x1c8] sm:$0xff]
  %v72 = vld [vmem:[%s0 + $0x1d0] sm:$0xff]
  %v73 = vld [vmem:[%s0 + $0x1d8] sm:$0xff]
  %v74 = vld [vmem:[%s0 + $0x1e0] sm:$0xff]
  %v75 = vld [vmem:[%s0 + $0x1e8] sm:$0xff]
  %v76 = vld [vmem:[%s0 + $0x1f0] sm:$0xff]
  %v77 = vld [vmem:[%s0 + $0x1f8] sm:$0xff]
  %v78 = vld [vmem:[%s0 + $0x200] sm:$0xff]
  %v79 = vld [vmem:[%s0 + $0x208] sm:$0xff]
  %v80 = vld [vmem:[%s0 + $0x210] sm:$0xff]
  %v81 = vld [vmem:[%s0 + $0x218] sm:$0xff]
  %v82 = vld [vmem:[%s0 + $0x220] sm:$0xff]
  %v83 = vld [vmem:[%s0 + $0x228] sm:$0xff]
  %v84 = vld [vmem:[%s0 + $0x230] sm:$0xff]
  %v85 = vld [vmem:[%s0 + $0x238] sm:$0xff]
  %v86 = vld [vmem:[%s0 + $0x240] sm:$0xff]
  %v87 = vld [vmem:[%s0 + $0x248] sm:$0xff]
  %v88 = vld [vmem:[%s0 + $0x250] sm:$0xff]
  %v89 = vld [vmem:[%s0 + $0x258] sm:$0xff]
  %v90 = vld [vmem:[%s0 + $0x260] sm:$0xff]
  %v91 = vld [vmem:[%s0 + $0x268] sm:$0xff]
  %v92 = vld [vmem:[%s0 + $0x270] sm:$0xff]
  %v93 = vld [vmem:[%s0 + $0x278] sm:$0xff]
  %v94 = vld [vmem:[%s0 + $0x280] sm:$0xff]
  %v95 = vld [vmem:[%s0 + $0x288] sm:$0xff]
  %v96 = vld [vmem:[%s0 + $0x290] sm:$0xff]
  %v97 = vld [vmem:[%s0 + $0x298] sm:$0xff]
  %v98 = vld [vmem:[%s0 + $0x2a0] sm:$0xff]
  %v99 = vld [vmem:[%s0 + $0x2a8] sm:$0xff]
  %v100 = vld [vmem:[%s0 + $0x2b0] sm:$0xff]
  %v101 = vld [vmem:[%s0 + $0x2b8] sm:$0xff]
  %v102 = vld [vmem:[%s0 + $0x2c0] sm:$0xff]
  %v103 = vld [vmem:[%s0 + $0x2c8] sm:$0xff]
  %v104 = vld [vmem:[%s0 + $0x2d0] sm:$0xff]
  %v105 = vld [vmem:[%s0 + $0x2d8] sm:$0xff]
  %v106 = vld [vmem:[%s0 + $0x2e0] sm:$0xff]
  %v107 = vld [vmem:[%s0 + $0x2e8] sm:$0xff]
  %v108 = vld [vmem:[%s0 + $0x2f0] sm:$0xff]
  %v109 = vld [vmem:[%s0 + $0x2f8] sm:$0xff]
  %v110 = vld [vmem:[%s0 + $0x300] sm:$0xff]
  %v111 = vld [vmem:[%s0 + $0x308] sm:$0xff]
  %v112 = vld [vmem:[%s0 + $0x310] sm:$0xff]
  %v113 = vld [vmem:[%s0 + $0x318] sm:$0xff]
  %v114 = vld [vmem:[%s0 + $0x320] sm:$0xff]
  %v115 = vld [vmem:[%s0 + $0x328] sm:$0xff]
  %v116 = vld [vmem:[%s0 + $0x330] sm:$0xff]
  %v117 = vld [vmem:[%s0 + $0x338] sm:$0xff]
  %v118 = vld [vmem:[%s0 + $0x340] sm:$0xff]
  %v119 = vld [vmem:[%s0 + $0x348] sm:$0xff]
  %v120 = vld [vmem:[%s0 + $0x350] sm:$0xff]
  %v121 = vld [vmem:[%s0 + $0x358] sm:$0xff]
  %v122 = vld [vmem:[%s0 + $0x360] sm:$0x1]
  %v123 = vld [vmem:[%s0 + $0x368] sm:$0x1]
  %v124 = vld [vmem:[%s0 + $0x370] sm:$0x1]
  %v125 = vld [vmem:[%s0 + $0x378] sm:$0x1]
  %v126 = vld [vmem:[%s0 + $0x380] sm:$0x1]
  %v127 = vld [vmem:[%s0 + $0x388] sm:$0x1]
  %v128 = vld [vmem:[%s0 + $0x390] sm:$0x1]
  %v129 = vld [vmem:[%s0 + $0x398] sm:$0x1]
  %v130 = vld [vmem:[%s0 + $0x3a0] sm:$0x1]
  %v131 = vld [vmem:[%s0 + $0x3a8] sm:$0x1]
  %v132 = vld [vmem:[%s0 + $0x3b0] sm:$0x1]
  %v133 = vld [vmem:[%s0 + $0x3b8] sm:$0x1]
  %v134 = vld [vmem:[%s0 + $0x3c0] sm:$0x1]
  %v135 = vld [vmem:[%s0 + $0x3c8] sm:$0x1]
  %v136 = vld [vmem:[%s0 + $0x3d0] sm:$0x1]
  %v137 = vld [vmem:[%s0 + $0x3d8] sm:$0x1]
  %v138 = vld [vmem:[%s0 + $0x3e0] sm:$0x1]
  %v139 = vld [vmem:[%s0 + $0x3e8] sm:$0x1]
  %v140 = vadd.f32 %v14, %v32
  %v141 = vadd.f32 %v140, %v50
  %v142 = vadd.f32 %v141, %v68
  %v143 = vadd.f32 %v142, %v86
  %v144 = vadd.f32 %v143, %v104
  %vm145 = vcmask 1040384
  %v146 = vsel %vm145, %v122, 0.0
  %v147 = vadd.f32 %v144, %v146
  %v148 = vrot.slane %v147, 4
  %v149 = vadd.f32 %v147, %v148
  %v150 = vrot.slane %v149, 2
  %v151 = vadd.f32 %v149, %v150
  %v152 = vrot.slane %v151, 1
  %v153 = vadd.f32 %v151, %v152
  %v154 = vadd.f32 %v15, %v33
  %v155 = vadd.f32 %v154, %v51
  %v156 = vadd.f32 %v155, %v69
  %v157 = vadd.f32 %v156, %v87
  %v158 = vadd.f32 %v157, %v105
  %v159 = vsel %vm145, %v123, 0.0
  %v160 = vadd.f32 %v158, %v159
  %v161 = vrot.slane %v160, 4
  %v162 = vadd.f32 %v160, %v161
  %v163 = vrot.slane %v162, 2
  %v164 = vadd.f32 %v162, %v163
  %v165 = vrot.slane %v164, 1
  %v166 = vadd.f32 %v164, %v165
  %v167 = vadd.f32 %v16, %v34
  %v168 = vadd.f32 %v167, %v52
  %v169 = vadd.f32 %v168, %v70
  %v170 = vadd.f32 %v169, %v88
  %v171 = vadd.f32 %v170, %v106
  %v172 = vsel %vm145, %v124, 0.0
  %v173 = vadd.f32 %v171, %v172
  %v174 = vrot.slane %v173, 4
  %v175 = vadd.f32 %v173, %v174
  %v176 = vrot.slane %v175, 2
  %v177 = vadd.f32 %v175, %v176
  %v178 = vrot.slane %v177, 1
  %v179 = vadd.f32 %v177, %v178
  %v180 = vadd.f32 %v17, %v35
  %v181 = vadd.f32 %v180, %v53
  %v182 = vadd.f32 %v181, %v71
  %v183 = vadd.f32 %v182, %v89
  %v184 = vadd.f32 %v183, %v107
  %v185 = vsel %vm145, %v125, 0.0
  %v186 = vadd.f32 %v184, %v185
  %v187 = vrot.slane %v186, 4
  %v188 = vadd.f32 %v186, %v187
  %v189 = vrot.slane %v188, 2
  %v190 = vadd.f32 %v188, %v189
  %v191 = vrot.slane %v190, 1
  %v192 = vadd.f32 %v190, %v191
  %v193 = vadd.f32 %v18, %v36
  %v194 = vadd.f32 %v193, %v54
  %v195 = vadd.f32 %v194, %v72
  %v196 = vadd.f32 %v195, %v90
  %v197 = vadd.f32 %v196, %v108
  %v198 = vsel %vm145, %v126, 0.0
  %v199 = vadd.f32 %v197, %v198
  %v200 = vrot.slane %v199, 4
  %v201 = vadd.f32 %v199, %v200
  %v202 = vrot.slane %v201, 2
  %v203 = vadd.f32 %v201, %v202
  %v204 = vrot.slane %v203, 1
  %v205 = vadd.f32 %v203, %v204
  %v206 = vadd.f32 %v19, %v37
  %v207 = vadd.f32 %v206, %v55
  %v208 = vadd.f32 %v207, %v73
  %v209 = vadd.f32 %v208, %v91
  %v210 = vadd.f32 %v209, %v109
  %v211 = vsel %vm145, %v127, 0.0
  %v212 = vadd.f32 %v210, %v211
  %v213 = vrot.slane %v212, 4
  %v214 = vadd.f32 %v212, %v213
  %v215 = vrot.slane %v214, 2
  %v216 = vadd.f32 %v214, %v215
  %v217 = vrot.slane %v216, 1
  %v218 = vadd.f32 %v216, %v217
  %v219 = vadd.f32 %v20, %v38
  %v220 = vadd.f32 %v219, %v56
  %v221 = vadd.f32 %v220, %v74
  %v222 = vadd.f32 %v221, %v92
  %v223 = vadd.f32 %v222, %v110
  %v224 = vsel %vm145, %v128, 0.0
  %v225 = vadd.f32 %v223, %v224
  %v226 = vrot.slane %v225, 4
  %v227 = vadd.f32 %v225, %v226
  %v228 = vrot.slane %v227, 2
  %v229 = vadd.f32 %v227, %v228
  %v230 = vrot.slane %v229, 1
  %v231 = vadd.f32 %v229, %v230
  %v232 = vadd.f32 %v21, %v39
  %v233 = vadd.f32 %v232, %v57
  %v234 = vadd.f32 %v233, %v75
  %v235 = vadd.f32 %v234, %v93
  %v236 = vadd.f32 %v235, %v111
  %v237 = vsel %vm145, %v129, 0.0
  %v238 = vadd.f32 %v236, %v237
  %v239 = vrot.slane %v238, 4
  %v240 = vadd.f32 %v238, %v239
  %v241 = vrot.slane %v240, 2
  %v242 = vadd.f32 %v240, %v241
  %v243 = vrot.slane %v242, 1
  %v244 = vadd.f32 %v242, %v243
  %v245 = vadd.f32 %v22, %v40
  %v246 = vadd.f32 %v245, %v58
  %v247 = vadd.f32 %v246, %v76
  %v248 = vadd.f32 %v247, %v94
  %v249 = vadd.f32 %v248, %v112
  %v250 = vsel %vm145, %v130, 0.0
  %v251 = vadd.f32 %v249, %v250
  %v252 = vrot.slane %v251, 4
  %v253 = vadd.f32 %v251, %v252
  %v254 = vrot.slane %v253, 2
  %v255 = vadd.f32 %v253, %v254
  %v256 = vrot.slane %v255, 1
  %v257 = vadd.f32 %v255, %v256
  %v258 = vadd.f32 %v23, %v41
  %v259 = vadd.f32 %v258, %v59
  %v260 = vadd.f32 %v259, %v77
  %v261 = vadd.f32 %v260, %v95
  %v262 = vadd.f32 %v261, %v113
  %v263 = vsel %vm145, %v131, 0.0
  %v264 = vadd.f32 %v262, %v263
  %v265 = vrot.slane %v264, 4
  %v266 = vadd.f32 %v264, %v265
  %v267 = vrot.slane %v266, 2
  %v268 = vadd.f32 %v266, %v267
  %v269 = vrot.slane %v268, 1
  %v270 = vadd.f32 %v268, %v269
  %v271 = vadd.f32 %v24, %v42
  %v272 = vadd.f32 %v271, %v60
  %v273 = vadd.f32 %v272, %v78
  %v274 = vadd.f32 %v273, %v96
  %v275 = vadd.f32 %v274, %v114
  %v276 = vsel %vm145, %v132, 0.0
  %v277 = vadd.f32 %v275, %v276
  %v278 = vrot.slane %v277, 4
  %v279 = vadd.f32 %v277, %v278
  %v280 = vrot.slane %v279, 2
  %v281 = vadd.f32 %v279, %v280
  %v282 = vrot.slane %v281, 1
  %v283 = vadd.f32 %v281, %v282
  %v284 = vadd.f32 %v25, %v43
  %v285 = vadd.f32 %v284, %v61
  %v286 = vadd.f32 %v285, %v79
  %v287 = vadd.f32 %v286, %v97
  %v288 = vadd.f32 %v287, %v115
  %v289 = vsel %vm145, %v133, 0.0
  %v290 = vadd.f32 %v288, %v289
  %v291 = vrot.slane %v290, 4
  %v292 = vadd.f32 %v290, %v291
  %v293 = vrot.slane %v292, 2
  %v294 = vadd.f32 %v292, %v293
  %v295 = vrot.slane %v294, 1
  %v296 = vadd.f32 %v294, %v295
  %v297 = vadd.f32 %v26, %v44
  %v298 = vadd.f32 %v297, %v62
  %v299 = vadd.f32 %v298, %v80
  %v300 = vadd.f32 %v299, %v98
  %v301 = vadd.f32 %v300, %v116
  %v302 = vsel %vm145, %v134, 0.0
  %v303 = vadd.f32 %v301, %v302
  %v304 = vrot.slane %v303, 4
  %v305 = vadd.f32 %v303, %v304
  %v306 = vrot.slane %v305, 2
  %v307 = vadd.f32 %v305, %v306
  %v308 = vrot.slane %v307, 1
  %v309 = vadd.f32 %v307, %v308
  %v310 = vadd.f32 %v27, %v45
  %v311 = vadd.f32 %v310, %v63
  %v312 = vadd.f32 %v311, %v81
  %v313 = vadd.f32 %v312, %v99
  %v314 = vadd.f32 %v313, %v117
  %v315 = vsel %vm145, %v135, 0.0
  %v316 = vadd.f32 %v314, %v315
  %v317 = vrot.slane %v316, 4
  %v318 = vadd.f32 %v316, %v317
  %v319 = vrot.slane %v318, 2
  %v320 = vadd.f32 %v318, %v319
  %v321 = vrot.slane %v320, 1
  %v322 = vadd.f32 %v320, %v321
  %v323 = vadd.f32 %v28, %v46
  %v324 = vadd.f32 %v323, %v64
  %v325 = vadd.f32 %v324, %v82
  %v326 = vadd.f32 %v325, %v100
  %v327 = vadd.f32 %v326, %v118
  %v328 = vsel %vm145, %v136, 0.0
  %v329 = vadd.f32 %v327, %v328
  %v330 = vrot.slane %v329, 4
  %v331 = vadd.f32 %v329, %v330
  %v332 = vrot.slane %v331, 2
  %v333 = vadd.f32 %v331, %v332
  %v334 = vrot.slane %v333, 1
  %v335 = vadd.f32 %v333, %v334
  %v336 = vadd.f32 %v29, %v47
  %v337 = vadd.f32 %v336, %v65
  %v338 = vadd.f32 %v337, %v83
  %v339 = vadd.f32 %v338, %v101
  %v340 = vadd.f32 %v339, %v119
  %v341 = vsel %vm145, %v137, 0.0
  %v342 = vadd.f32 %v340, %v341
  %v343 = vrot.slane %v342, 4
  %v344 = vadd.f32 %v342, %v343
  %v345 = vrot.slane %v344, 2
  %v346 = vadd.f32 %v344, %v345
  %v347 = vrot.slane %v346, 1
  %v348 = vadd.f32 %v346, %v347
  %v349 = vadd.f32 %v30, %v48
  %v350 = vadd.f32 %v349, %v66
  %v351 = vadd.f32 %v350, %v84
  %v352 = vadd.f32 %v351, %v102
  %v353 = vadd.f32 %v352, %v120
  %v354 = vsel %vm145, %v138, 0.0
  %v355 = vadd.f32 %v353, %v354
  %v356 = vrot.slane %v355, 4
  %v357 = vadd.f32 %v355, %v356
  %v358 = vrot.slane %v357, 2
  %v359 = vadd.f32 %v357, %v358
  %v360 = vrot.slane %v359, 1
  %v361 = vadd.f32 %v359, %v360
  %v362 = vadd.f32 %v31, %v49
  %v363 = vadd.f32 %v362, %v67
  %v364 = vadd.f32 %v363, %v85
  %v365 = vadd.f32 %v364, %v103
  %v366 = vadd.f32 %v365, %v121
  %v367 = vsel %vm145, %v139, 0.0
  %v368 = vadd.f32 %v366, %v367
  %v369 = vrot.slane %v368, 4
  %v370 = vadd.f32 %v368, %v369
  %v371 = vrot.slane %v370, 2
  %v372 = vadd.f32 %v370, %v371
  %v373 = vrot.slane %v372, 1
  %v374 = vadd.f32 %v372, %v373
  %v375 = vmul.f32 %v153, 0.020408163
  %v376 = vmul.f32 %v166, 0.020408163
  %v377 = vmul.f32 %v179, 0.020408163
  %v378 = vmul.f32 %v192, 0.020408163
  %v379 = vmul.f32 %v205, 0.020408163
  %v380 = vmul.f32 %v218, 0.020408163
  %v381 = vmul.f32 %v231, 0.020408163
  %v382 = vmul.f32 %v244, 0.020408163
  %v383 = vmul.f32 %v257, 0.020408163
  %v384 = vmul.f32 %v270, 0.020408163
  %v385 = vmul.f32 %v283, 0.020408163
  %v386 = vmul.f32 %v296, 0.020408163
  %v387 = vmul.f32 %v309, 0.020408163
  %v388 = vmul.f32 %v322, 0.020408163
  %v389 = vmul.f32 %v335, 0.020408163
  %v390 = vmul.f32 %v348, 0.020408163
  %v391 = vmul.f32 %v361, 0.020408163
  %v392 = vmul.f32 %v374, 0.020408163
  %v393 = vsub.f32 %v14, %v375
  %v394 = vsub.f32 %v15, %v376
  %v395 = vsub.f32 %v16, %v377
  %v396 = vsub.f32 %v17, %v378
  %v397 = vsub.f32 %v18, %v379
  %v398 = vsub.f32 %v19, %v380
  %v399 = vsub.f32 %v20, %v381
  %v400 = vsub.f32 %v21, %v382
  %v401 = vsub.f32 %v22, %v383
  %v402 = vsub.f32 %v23, %v384
  %v403 = vsub.f32 %v24, %v385
  %v404 = vsub.f32 %v25, %v386
  %v405 = vsub.f32 %v26, %v387
  %v406 = vsub.f32 %v27, %v388
  %v407 = vsub.f32 %v28, %v389
  %v408 = vsub.f32 %v29, %v390
  %v409 = vsub.f32 %v30, %v391
  %v410 = vsub.f32 %v31, %v392
  %v411 = vsub.f32 %v32, %v375
  %v412 = vsub.f32 %v33, %v376
  %v413 = vsub.f32 %v34, %v377
  %v414 = vsub.f32 %v35, %v378
  %v415 = vsub.f32 %v36, %v379
  %v416 = vsub.f32 %v37, %v380
  %v417 = vsub.f32 %v38, %v381
  %v418 = vsub.f32 %v39, %v382
  %v419 = vsub.f32 %v40, %v383
  %v420 = vsub.f32 %v41, %v384
  %v421 = vsub.f32 %v42, %v385
  %v422 = vsub.f32 %v43, %v386
  %v423 = vsub.f32 %v44, %v387
  %v424 = vsub.f32 %v45, %v388
  %v425 = vsub.f32 %v46, %v389
  %v426 = vsub.f32 %v47, %v390
  %v427 = vsub.f32 %v48, %v391
  %v428 = vsub.f32 %v49, %v392
  %v429 = vsub.f32 %v50, %v375
  %v430 = vsub.f32 %v51, %v376
  %v431 = vsub.f32 %v52, %v377
  %v432 = vsub.f32 %v53, %v378
  %v433 = vsub.f32 %v54, %v379
  %v434 = vsub.f32 %v55, %v380
  %v435 = vsub.f32 %v56, %v381
  %v436 = vsub.f32 %v57, %v382
  %v437 = vsub.f32 %v58, %v383
  %v438 = vsub.f32 %v59, %v384
  %v439 = vsub.f32 %v60, %v385
  %v440 = vsub.f32 %v61, %v386
  %v441 = vsub.f32 %v62, %v387
  %v442 = vsub.f32 %v63, %v388
  %v443 = vsub.f32 %v64, %v389
  %v444 = vsub.f32 %v65, %v390
  %v445 = vsub.f32 %v66, %v391
  %v446 = vsub.f32 %v67, %v392
  %v447 = vsub.f32 %v68, %v375
  %v448 = vsub.f32 %v69, %v376
  %v449 = vsub.f32 %v70, %v377
  %v450 = vsub.f32 %v71, %v378
  %v451 = vsub.f32 %v72, %v379
  %v452 = vsub.f32 %v73, %v380
  %v453 = vsub.f32 %v74, %v381
  %v454 = vsub.f32 %v75, %v382
  %v455 = vsub.f32 %v76, %v383
  %v456 = vsub.f32 %v77, %v384
  %v457 = vsub.f32 %v78, %v385
  %v458 = vsub.f32 %v79, %v386
  %v459 = vsub.f32 %v80, %v387
  %v460 = vsub.f32 %v81, %v388
  %v461 = vsub.f32 %v82, %v389
  %v462 = vsub.f32 %v83, %v390
  %v463 = vsub.f32 %v84, %v391
  %v464 = vsub.f32 %v85, %v392
  %v465 = vsub.f32 %v86, %v375
  %v466 = vsub.f32 %v87, %v376
  %v467 = vsub.f32 %v88, %v377
  %v468 = vsub.f32 %v89, %v378
  %v469 = vsub.f32 %v90, %v379
  %v470 = vsub.f32 %v91, %v380
  %v471 = vsub.f32 %v92, %v381
  %v472 = vsub.f32 %v93, %v382
  %v473 = vsub.f32 %v94, %v383
  %v474 = vsub.f32 %v95, %v384
  %v475 = vsub.f32 %v96, %v385
  %v476 = vsub.f32 %v97, %v386
  %v477 = vsub.f32 %v98, %v387
  %v478 = vsub.f32 %v99, %v388
  %v479 = vsub.f32 %v100, %v389
  %v480 = vsub.f32 %v101, %v390
  %v481 = vsub.f32 %v102, %v391
  %v482 = vsub.f32 %v103, %v392
  %v483 = vsub.f32 %v104, %v375
  %v484 = vsub.f32 %v105, %v376
  %v485 = vsub.f32 %v106, %v377
  %v486 = vsub.f32 %v107, %v378
  %v487 = vsub.f32 %v108, %v379
  %v488 = vsub.f32 %v109, %v380
  %v489 = vsub.f32 %v110, %v381
  %v490 = vsub.f32 %v111, %v382
  %v491 = vsub.f32 %v112, %v383
  %v492 = vsub.f32 %v113, %v384
  %v493 = vsub.f32 %v114, %v385
  %v494 = vsub.f32 %v115, %v386
  %v495 = vsub.f32 %v116, %v387
  %v496 = vsub.f32 %v117, %v388
  %v497 = vsub.f32 %v118, %v389
  %v498 = vsub.f32 %v119, %v390
  %v499 = vsub.f32 %v120, %v391
  %v500 = vsub.f32 %v121, %v392
  %v501 = vsub.f32 %v122, %v375
  %v502 = vsub.f32 %v123, %v376
  %v503 = vsub.f32 %v124, %v377
  %v504 = vsub.f32 %v125, %v378
  %v505 = vsub.f32 %v126, %v379
  %v506 = vsub.f32 %v127, %v380
  %v507 = vsub.f32 %v128, %v381
  %v508 = vsub.f32 %v129, %v382
  %v509 = vsub.f32 %v130, %v383
  %v510 = vsub.f32 %v131, %v384
  %v511 = vsub.f32 %v132, %v385
  %v512 = vsub.f32 %v133, %v386
  %v513 = vsub.f32 %v134, %v387
  %v514 = vsub.f32 %v135, %v388
  %v515 = vsub.f32 %v136, %v389
  %v516 = vsub.f32 %v137, %v390
  %v517 = vsub.f32 %v138, %v391
  %v518 = vsub.f32 %v139, %v392
  %v519 = vmul.f32 %v393, %v393
  %v520 = vmul.f32 %v394, %v394
  %v521 = vmul.f32 %v395, %v395
  %v522 = vmul.f32 %v396, %v396
  %v523 = vmul.f32 %v397, %v397
  %v524 = vmul.f32 %v398, %v398
  %v525 = vmul.f32 %v399, %v399
  %v526 = vmul.f32 %v400, %v400
  %v527 = vmul.f32 %v401, %v401
  %v528 = vmul.f32 %v402, %v402
  %v529 = vmul.f32 %v403, %v403
  %v530 = vmul.f32 %v404, %v404
  %v531 = vmul.f32 %v405, %v405
  %v532 = vmul.f32 %v406, %v406
  %v533 = vmul.f32 %v407, %v407
  %v534 = vmul.f32 %v408, %v408
  %v535 = vmul.f32 %v409, %v409
  %v536 = vmul.f32 %v410, %v410
  %v537 = vmul.f32 %v411, %v411
  %v538 = vmul.f32 %v412, %v412
  %v539 = vmul.f32 %v413, %v413
  %v540 = vmul.f32 %v414, %v414
  %v541 = vmul.f32 %v415, %v415
  %v542 = vmul.f32 %v416, %v416
  %v543 = vmul.f32 %v417, %v417
  %v544 = vmul.f32 %v418, %v418
  %v545 = vmul.f32 %v419, %v419
  %v546 = vmul.f32 %v420, %v420
  %v547 = vmul.f32 %v421, %v421
  %v548 = vmul.f32 %v422, %v422
  %v549 = vmul.f32 %v423, %v423
  %v550 = vmul.f32 %v424, %v424
  %v551 = vmul.f32 %v425, %v425
  %v552 = vmul.f32 %v426, %v426
  %v553 = vmul.f32 %v427, %v427
  %v554 = vmul.f32 %v428, %v428
  %v555 = vmul.f32 %v429, %v429
  %v556 = vmul.f32 %v430, %v430
  %v557 = vmul.f32 %v431, %v431
  %v558 = vmul.f32 %v432, %v432
  %v559 = vmul.f32 %v433, %v433
  %v560 = vmul.f32 %v434, %v434
  %v561 = vmul.f32 %v435, %v435
  %v562 = vmul.f32 %v436, %v436
  %v563 = vmul.f32 %v437, %v437
  %v564 = vmul.f32 %v438, %v438
  %v565 = vmul.f32 %v439, %v439
  %v566 = vmul.f32 %v440, %v440
  %v567 = vmul.f32 %v441, %v441
  %v568 = vmul.f32 %v442, %v442
  %v569 = vmul.f32 %v443, %v443
  %v570 = vmul.f32 %v444, %v444
  %v571 = vmul.f32 %v445, %v445
  %v572 = vmul.f32 %v446, %v446
  %v573 = vmul.f32 %v447, %v447
  %v574 = vmul.f32 %v448, %v448
  %v575 = vmul.f32 %v449, %v449
  %v576 = vmul.f32 %v450, %v450
  %v577 = vmul.f32 %v451, %v451
  %v578 = vmul.f32 %v452, %v452
  %v579 = vmul.f32 %v453, %v453
  %v580 = vmul.f32 %v454, %v454
  %v581 = vmul.f32 %v455, %v455
  %v582 = vmul.f32 %v456, %v456
  %v583 = vmul.f32 %v457, %v457
  %v584 = vmul.f32 %v458, %v458
  %v585 = vmul.f32 %v459, %v459
  %v586 = vmul.f32 %v460, %v460
  %v587 = vmul.f32 %v461, %v461
  %v588 = vmul.f32 %v462, %v462
  %v589 = vmul.f32 %v463, %v463
  %v590 = vmul.f32 %v464, %v464
  %v591 = vmul.f32 %v465, %v465
  %v592 = vmul.f32 %v466, %v466
  %v593 = vmul.f32 %v467, %v467
  %v594 = vmul.f32 %v468, %v468
  %v595 = vmul.f32 %v469, %v469
  %v596 = vmul.f32 %v470, %v470
  %v597 = vmul.f32 %v471, %v471
  %v598 = vmul.f32 %v472, %v472
  %v599 = vmul.f32 %v473, %v473
  %v600 = vmul.f32 %v474, %v474
  %v601 = vmul.f32 %v475, %v475
  %v602 = vmul.f32 %v476, %v476
  %v603 = vmul.f32 %v477, %v477
  %v604 = vmul.f32 %v478, %v478
  %v605 = vmul.f32 %v479, %v479
  %v606 = vmul.f32 %v480, %v480
  %v607 = vmul.f32 %v481, %v481
  %v608 = vmul.f32 %v482, %v482
  %v609 = vmul.f32 %v483, %v483
  %v610 = vmul.f32 %v484, %v484
  %v611 = vmul.f32 %v485, %v485
  %v612 = vmul.f32 %v486, %v486
  %v613 = vmul.f32 %v487, %v487
  %v614 = vmul.f32 %v488, %v488
  %v615 = vmul.f32 %v489, %v489
  %v616 = vmul.f32 %v490, %v490
  %v617 = vmul.f32 %v491, %v491
  %v618 = vmul.f32 %v492, %v492
  %v619 = vmul.f32 %v493, %v493
  %v620 = vmul.f32 %v494, %v494
  %v621 = vmul.f32 %v495, %v495
  %v622 = vmul.f32 %v496, %v496
  %v623 = vmul.f32 %v497, %v497
  %v624 = vmul.f32 %v498, %v498
  %v625 = vmul.f32 %v499, %v499
  %v626 = vmul.f32 %v500, %v500
  %v627 = vmul.f32 %v501, %v501
  %v628 = vmul.f32 %v502, %v502
  %v629 = vmul.f32 %v503, %v503
  %v630 = vmul.f32 %v504, %v504
  %v631 = vmul.f32 %v505, %v505
  %v632 = vmul.f32 %v506, %v506
  %v633 = vmul.f32 %v507, %v507
  %v634 = vmul.f32 %v508, %v508
  %v635 = vmul.f32 %v509, %v509
  %v636 = vmul.f32 %v510, %v510
  %v637 = vmul.f32 %v511, %v511
  %v638 = vmul.f32 %v512, %v512
  %v639 = vmul.f32 %v513, %v513
  %v640 = vmul.f32 %v514, %v514
  %v641 = vmul.f32 %v515, %v515
  %v642 = vmul.f32 %v516, %v516
  %v643 = vmul.f32 %v517, %v517
  %v644 = vmul.f32 %v518, %v518
  %v645 = vadd.f32 %v519, %v537
  %v646 = vadd.f32 %v645, %v555
  %v647 = vadd.f32 %v646, %v573
  %v648 = vadd.f32 %v647, %v591
  %v649 = vadd.f32 %v648, %v609
  %v650 = vsel %vm145, %v627, 0.0
  %v651 = vadd.f32 %v649, %v650
  %v652 = vrot.slane %v651, 4
  %v653 = vadd.f32 %v651, %v652
  %v654 = vrot.slane %v653, 2
  %v655 = vadd.f32 %v653, %v654
  %v656 = vrot.slane %v655, 1
  %v657 = vadd.f32 %v655, %v656
  %v658 = vadd.f32 %v520, %v538
  %v659 = vadd.f32 %v658, %v556
  %v660 = vadd.f32 %v659, %v574
  %v661 = vadd.f32 %v660, %v592
  %v662 = vadd.f32 %v661, %v610
  %v663 = vsel %vm145, %v628, 0.0
  %v664 = vadd.f32 %v662, %v663
  %v665 = vrot.slane %v664, 4
  %v666 = vadd.f32 %v664, %v665
  %v667 = vrot.slane %v666, 2
  %v668 = vadd.f32 %v666, %v667
  %v669 = vrot.slane %v668, 1
  %v670 = vadd.f32 %v668, %v669
  %v671 = vadd.f32 %v521, %v539
  %v672 = vadd.f32 %v671, %v557
  %v673 = vadd.f32 %v672, %v575
  %v674 = vadd.f32 %v673, %v593
  %v675 = vadd.f32 %v674, %v611
  %v676 = vsel %vm145, %v629, 0.0
  %v677 = vadd.f32 %v675, %v676
  %v678 = vrot.slane %v677, 4
  %v679 = vadd.f32 %v677, %v678
  %v680 = vrot.slane %v679, 2
  %v681 = vadd.f32 %v679, %v680
  %v682 = vrot.slane %v681, 1
  %v683 = vadd.f32 %v681, %v682
  %v684 = vadd.f32 %v522, %v540
  %v685 = vadd.f32 %v684, %v558
  %v686 = vadd.f32 %v685, %v576
  %v687 = vadd.f32 %v686, %v594
  %v688 = vadd.f32 %v687, %v612
  %v689 = vsel %vm145, %v630, 0.0
  %v690 = vadd.f32 %v688, %v689
  %v691 = vrot.slane %v690, 4
  %v692 = vadd.f32 %v690, %v691
  %v693 = vrot.slane %v692, 2
  %v694 = vadd.f32 %v692, %v693
  %v695 = vrot.slane %v694, 1
  %v696 = vadd.f32 %v694, %v695
  %v697 = vadd.f32 %v523, %v541
  %v698 = vadd.f32 %v697, %v559
  %v699 = vadd.f32 %v698, %v577
  %v700 = vadd.f32 %v699, %v595
  %v701 = vadd.f32 %v700, %v613
  %v702 = vsel %vm145, %v631, 0.0
  %v703 = vadd.f32 %v701, %v702
  %v704 = vrot.slane %v703, 4
  %v705 = vadd.f32 %v703, %v704
  %v706 = vrot.slane %v705, 2
  %v707 = vadd.f32 %v705, %v706
  %v708 = vrot.slane %v707, 1
  %v709 = vadd.f32 %v707, %v708
  %v710 = vadd.f32 %v524, %v542
  %v711 = vadd.f32 %v710, %v560
  %v712 = vadd.f32 %v711, %v578
  %v713 = vadd.f32 %v712, %v596
  %v714 = vadd.f32 %v713, %v614
  %v715 = vsel %vm145, %v632, 0.0
  %v716 = vadd.f32 %v714, %v715
  %v717 = vrot.slane %v716, 4
  %v718 = vadd.f32 %v716, %v717
  %v719 = vrot.slane %v718, 2
  %v720 = vadd.f32 %v718, %v719
  %v721 = vrot.slane %v720, 1
  %v722 = vadd.f32 %v720, %v721
  %v723 = vadd.f32 %v525, %v543
  %v724 = vadd.f32 %v723, %v561
  %v725 = vadd.f32 %v724, %v579
  %v726 = vadd.f32 %v725, %v597
  %v727 = vadd.f32 %v726, %v615
  %v728 = vsel %vm145, %v633, 0.0
  %v729 = vadd.f32 %v727, %v728
  %v730 = vrot.slane %v729, 4
  %v731 = vadd.f32 %v729, %v730
  %v732 = vrot.slane %v731, 2
  %v733 = vadd.f32 %v731, %v732
  %v734 = vrot.slane %v733, 1
  %v735 = vadd.f32 %v733, %v734
  %v736 = vadd.f32 %v526, %v544
  %v737 = vadd.f32 %v736, %v562
  %v738 = vadd.f32 %v737, %v580
  %v739 = vadd.f32 %v738, %v598
  %v740 = vadd.f32 %v739, %v616
  %v741 = vsel %vm145, %v634, 0.0
  %v742 = vadd.f32 %v740, %v741
  %v743 = vrot.slane %v742, 4
  %v744 = vadd.f32 %v742, %v743
  %v745 = vrot.slane %v744, 2
  %v746 = vadd.f32 %v744, %v745
  %v747 = vrot.slane %v746, 1
  %v748 = vadd.f32 %v746, %v747
  %v749 = vadd.f32 %v527, %v545
  %v750 = vadd.f32 %v749, %v563
  %v751 = vadd.f32 %v750, %v581
  %v752 = vadd.f32 %v751, %v599
  %v753 = vadd.f32 %v752, %v617
  %v754 = vsel %vm145, %v635, 0.0
  %v755 = vadd.f32 %v753, %v754
  %v756 = vrot.slane %v755, 4
  %v757 = vadd.f32 %v755, %v756
  %v758 = vrot.slane %v757, 2
  %v759 = vadd.f32 %v757, %v758
  %v760 = vrot.slane %v759, 1
  %v761 = vadd.f32 %v759, %v760
  %v762 = vadd.f32 %v528, %v546
  %v763 = vadd.f32 %v762, %v564
  %v764 = vadd.f32 %v763, %v582
  %v765 = vadd.f32 %v764, %v600
  %v766 = vadd.f32 %v765, %v618
  %v767 = vsel %vm145, %v636, 0.0
  %v768 = vadd.f32 %v766, %v767
  %v769 = vrot.slane %v768, 4
  %v770 = vadd.f32 %v768, %v769
  %v771 = vrot.slane %v770, 2
  %v772 = vadd.f32 %v770, %v771
  %v773 = vrot.slane %v772, 1
  %v774 = vadd.f32 %v772, %v773
  %v775 = vadd.f32 %v529, %v547
  %v776 = vadd.f32 %v775, %v565
  %v777 = vadd.f32 %v776, %v583
  %v778 = vadd.f32 %v777, %v601
  %v779 = vadd.f32 %v778, %v619
  %v780 = vsel %vm145, %v637, 0.0
  %v781 = vadd.f32 %v779, %v780
  %v782 = vrot.slane %v781, 4
  %v783 = vadd.f32 %v781, %v782
  %v784 = vrot.slane %v783, 2
  %v785 = vadd.f32 %v783, %v784
  %v786 = vrot.slane %v785, 1
  %v787 = vadd.f32 %v785, %v786
  %v788 = vadd.f32 %v530, %v548
  %v789 = vadd.f32 %v788, %v566
  %v790 = vadd.f32 %v789, %v584
  %v791 = vadd.f32 %v790, %v602
  %v792 = vadd.f32 %v791, %v620
  %v793 = vsel %vm145, %v638, 0.0
  %v794 = vadd.f32 %v792, %v793
  %v795 = vrot.slane %v794, 4
  %v796 = vadd.f32 %v794, %v795
  %v797 = vrot.slane %v796, 2
  %v798 = vadd.f32 %v796, %v797
  %v799 = vrot.slane %v798, 1
  %v800 = vadd.f32 %v798, %v799
  %v801 = vadd.f32 %v531, %v549
  %v802 = vadd.f32 %v801, %v567
  %v803 = vadd.f32 %v802, %v585
  %v804 = vadd.f32 %v803, %v603
  %v805 = vadd.f32 %v804, %v621
  %v806 = vsel %vm145, %v639, 0.0
  %v807 = vadd.f32 %v805, %v806
  %v808 = vrot.slane %v807, 4
  %v809 = vadd.f32 %v807, %v808
  %v810 = vrot.slane %v809, 2
  %v811 = vadd.f32 %v809, %v810
  %v812 = vrot.slane %v811, 1
  %v813 = vadd.f32 %v811, %v812
  %v814 = vadd.f32 %v532, %v550
  %v815 = vadd.f32 %v814, %v568
  %v816 = vadd.f32 %v815, %v586
  %v817 = vadd.f32 %v816, %v604
  %v818 = vadd.f32 %v817, %v622
  %v819 = vsel %vm145, %v640, 0.0
  %v820 = vadd.f32 %v818, %v819
  %v821 = vrot.slane %v820, 4
  %v822 = vadd.f32 %v820, %v821
  %v823 = vrot.slane %v822, 2
  %v824 = vadd.f32 %v822, %v823
  %v825 = vrot.slane %v824, 1
  %v826 = vadd.f32 %v824, %v825
  %v827 = vadd.f32 %v533, %v551
  %v828 = vadd.f32 %v827, %v569
  %v829 = vadd.f32 %v828, %v587
  %v830 = vadd.f32 %v829, %v605
  %v831 = vadd.f32 %v830, %v623
  %v832 = vsel %vm145, %v641, 0.0
  %v833 = vadd.f32 %v831, %v832
  %v834 = vrot.slane %v833, 4
  %v835 = vadd.f32 %v833, %v834
  %v836 = vrot.slane %v835, 2
  %v837 = vadd.f32 %v835, %v836
  %v838 = vrot.slane %v837, 1
  %v839 = vadd.f32 %v837, %v838
  %v840 = vadd.f32 %v534, %v552
  %v841 = vadd.f32 %v840, %v570
  %v842 = vadd.f32 %v841, %v588
  %v843 = vadd.f32 %v842, %v606
  %v844 = vadd.f32 %v843, %v624
  %v845 = vsel %vm145, %v642, 0.0
  %v846 = vadd.f32 %v844, %v845
  %v847 = vrot.slane %v846, 4
  %v848 = vadd.f32 %v846, %v847
  %v849 = vrot.slane %v848, 2
  %v850 = vadd.f32 %v848, %v849
  %v851 = vrot.slane %v850, 1
  %v852 = vadd.f32 %v850, %v851
  %v853 = vadd.f32 %v535, %v553
  %v854 = vadd.f32 %v853, %v571
  %v855 = vadd.f32 %v854, %v589
  %v856 = vadd.f32 %v855, %v607
  %v857 = vadd.f32 %v856, %v625
  %v858 = vsel %vm145, %v643, 0.0
  %v859 = vadd.f32 %v857, %v858
  %v860 = vrot.slane %v859, 4
  %v861 = vadd.f32 %v859, %v860
  %v862 = vrot.slane %v861, 2
  %v863 = vadd.f32 %v861, %v862
  %v864 = vrot.slane %v863, 1
  %v865 = vadd.f32 %v863, %v864
  %v866 = vadd.f32 %v536, %v554
  %v867 = vadd.f32 %v866, %v572
  %v868 = vadd.f32 %v867, %v590
  %v869 = vadd.f32 %v868, %v608
  %v870 = vadd.f32 %v869, %v626
  %v871 = vsel %vm145, %v644, 0.0
  %v872 = vadd.f32 %v870, %v871
  %v873 = vrot.slane %v872, 4
  %v874 = vadd.f32 %v872, %v873
  %v875 = vrot.slane %v874, 2
  %v876 = vadd.f32 %v874, %v875
  %v877 = vrot.slane %v876, 1
  %v878 = vadd.f32 %v876, %v877
  %v879 = vmul.f32 %v657, 0.020408163
  %v880 = vmul.f32 %v670, 0.020408163
  %v881 = vmul.f32 %v683, 0.020408163
  %v882 = vmul.f32 %v696, 0.020408163
  %v883 = vmul.f32 %v709, 0.020408163
  %v884 = vmul.f32 %v722, 0.020408163
  %v885 = vmul.f32 %v735, 0.020408163
  %v886 = vmul.f32 %v748, 0.020408163
  %v887 = vmul.f32 %v761, 0.020408163
  %v888 = vmul.f32 %v774, 0.020408163
  %v889 = vmul.f32 %v787, 0.020408163
  %v890 = vmul.f32 %v800, 0.020408163
  %v891 = vmul.f32 %v813, 0.020408163
  %v892 = vmul.f32 %v826, 0.020408163
  %v893 = vmul.f32 %v839, 0.020408163
  %v894 = vmul.f32 %v852, 0.020408163
  %v895 = vmul.f32 %v865, 0.020408163
  %v896 = vmul.f32 %v878, 0.020408163
  %v897 = vadd.f32 %v879, 0.001
  %v898 = vadd.f32 %v880, 0.001
  %v899 = vadd.f32 %v881, 0.001
  %v900 = vadd.f32 %v882, 0.001
  %v901 = vadd.f32 %v883, 0.001
  %v902 = vadd.f32 %v884, 0.001
  %v903 = vadd.f32 %v885, 0.001
  %v904 = vadd.f32 %v886, 0.001
  %v905 = vadd.f32 %v887, 0.001
  %v906 = vadd.f32 %v888, 0.001
  %v907 = vadd.f32 %v889, 0.001
  %v908 = vadd.f32 %v890, 0.001
  %v909 = vadd.f32 %v891, 0.001
  %v910 = vadd.f32 %v892, 0.001
  %v911 = vadd.f32 %v893, 0.001
  %v912 = vadd.f32 %v894, 0.001
  %v913 = vadd.f32 %v895, 0.001
  %v914 = vadd.f32 %v896, 0.001
  %v915 = vrsqrt.pop %v897
  %v916 = vrsqrt.pop %v898
  %v917 = vrsqrt.pop %v899
  %v918 = vrsqrt.pop %v900
  %v919 = vrsqrt.pop %v901
  %v920 = vrsqrt.pop %v902
  %v921 = vrsqrt.pop %v903
  %v922 = vrsqrt.pop %v904
  %v923 = vrsqrt.pop %v905
  %v924 = vrsqrt.pop %v906
  %v925 = vrsqrt.pop %v907
  %v926 = vrsqrt.pop %v908
  %v927 = vrsqrt.pop %v909
  %v928 = vrsqrt.pop %v910
  %v929 = vrsqrt.pop %v911
  %v930 = vrsqrt.pop %v912
  %v931 = vrsqrt.pop %v913
  %v932 = vrsqrt.pop %v914
  %v933 = vld [vmem:[%s1] sm:$0xff]
  %v934 = vld [vmem:[%s1 + $0x8] sm:$0xff]
  %v935 = vld [vmem:[%s1 + $0x10] sm:$0x3]
  %v939 = vlaneseq
  %v940 = vshrl.u32 %v939, 7
  %v941 = vsub.s32 0, %v940
  %v942 = vrot.slane %v933, %v941
  %v943 = vlaneseq
  %v944 = vshrl.u32 %v943, 7
  %v945 = vsub.s32 1, %v944
  %v946 = vrot.slane %v933, %v945
  %v947 = vlaneseq
  %v948 = vshrl.u32 %v947, 7
  %v949 = vsub.s32 2, %v948
  %v950 = vrot.slane %v933, %v949
  %v951 = vlaneseq
  %v952 = vshrl.u32 %v951, 7
  %v953 = vsub.s32 3, %v952
  %v954 = vrot.slane %v933, %v953
  %v955 = vlaneseq
  %v956 = vshrl.u32 %v955, 7
  %v957 = vsub.s32 4, %v956
  %v958 = vrot.slane %v933, %v957
  %v959 = vlaneseq
  %v960 = vshrl.u32 %v959, 7
  %v961 = vsub.s32 5, %v960
  %v962 = vrot.slane %v933, %v961
  %v963 = vlaneseq
  %v964 = vshrl.u32 %v963, 7
  %v965 = vsub.s32 6, %v964
  %v966 = vrot.slane %v933, %v965
  %v967 = vlaneseq
  %v968 = vshrl.u32 %v967, 7
  %v969 = vsub.s32 7, %v968
  %v970 = vrot.slane %v933, %v969
  %v971 = vlaneseq
  %v972 = vshrl.u32 %v971, 7
  %v973 = vsub.s32 0, %v972
  %v974 = vrot.slane %v934, %v973
  %v975 = vlaneseq
  %v976 = vshrl.u32 %v975, 7
  %v977 = vsub.s32 1, %v976
  %v978 = vrot.slane %v934, %v977
  %v979 = vlaneseq
  %v980 = vshrl.u32 %v979, 7
  %v981 = vsub.s32 2, %v980
  %v982 = vrot.slane %v934, %v981
  %v983 = vlaneseq
  %v984 = vshrl.u32 %v983, 7
  %v985 = vsub.s32 3, %v984
  %v986 = vrot.slane %v934, %v985
  %v987 = vlaneseq
  %v988 = vshrl.u32 %v987, 7
  %v989 = vsub.s32 4, %v988
  %v990 = vrot.slane %v934, %v989
  %v991 = vlaneseq
  %v992 = vshrl.u32 %v991, 7
  %v993 = vsub.s32 5, %v992
  %v994 = vrot.slane %v934, %v993
  %v995 = vlaneseq
  %v996 = vshrl.u32 %v995, 7
  %v997 = vsub.s32 6, %v996
  %v998 = vrot.slane %v934, %v997
  %v999 = vlaneseq
  %v1000 = vshrl.u32 %v999, 7
  %v1001 = vsub.s32 7, %v1000
  %v1002 = vrot.slane %v934, %v1001
  %v1003 = vlaneseq
  %v1004 = vshrl.u32 %v1003, 7
  %v1005 = vsub.s32 0, %v1004
  %v1006 = vrot.slane %v935, %v1005
  %v1007 = vlaneseq
  %v1008 = vshrl.u32 %v1007, 7
  %v1009 = vsub.s32 1, %v1008
  %v1010 = vrot.slane %v935, %v1009
  %v1029 = vmul.f32 %v915, %v942
  %v1030 = vmul.f32 %v916, %v946
  %v1031 = vmul.f32 %v917, %v950
  %v1032 = vmul.f32 %v918, %v954
  %v1033 = vmul.f32 %v919, %v958
  %v1034 = vmul.f32 %v920, %v962
  %v1035 = vmul.f32 %v921, %v966
  %v1036 = vmul.f32 %v922, %v970
  %v1037 = vmul.f32 %v923, %v974
  %v1038 = vmul.f32 %v924, %v978
  %v1039 = vmul.f32 %v925, %v982
  %v1040 = vmul.f32 %v926, %v986
  %v1041 = vmul.f32 %v927, %v990
  %v1042 = vmul.f32 %v928, %v994
  %v1043 = vmul.f32 %v929, %v998
  %v1044 = vmul.f32 %v930, %v1002
  %v1045 = vmul.f32 %v931, %v1006
  %v1046 = vmul.f32 %v932, %v1010
  %v1047 = vlaneseq
  %v1048 = vshrl.u32 %v1047, 7
  %v1049 = vsub.s32 0, %v1048
  %v1050 = vrot.slane %v1029, %v1049
  %v1051 = vlaneseq
  %v1052 = vshrl.u32 %v1051, 7
  %v1053 = vsub.s32 0, %v1052
  %v1054 = vrot.slane %v1030, %v1053
  %v1055 = vlaneseq
  %v1056 = vshrl.u32 %v1055, 7
  %v1057 = vsub.s32 0, %v1056
  %v1058 = vrot.slane %v1031, %v1057
  %v1059 = vlaneseq
  %v1060 = vshrl.u32 %v1059, 7
  %v1061 = vsub.s32 0, %v1060
  %v1062 = vrot.slane %v1032, %v1061
  %v1063 = vlaneseq
  %v1064 = vshrl.u32 %v1063, 7
  %v1065 = vsub.s32 0, %v1064
  %v1066 = vrot.slane %v1033, %v1065
  %v1067 = vlaneseq
  %v1068 = vshrl.u32 %v1067, 7
  %v1069 = vsub.s32 0, %v1068
  %v1070 = vrot.slane %v1034, %v1069
  %v1071 = vlaneseq
  %v1072 = vshrl.u32 %v1071, 7
  %v1073 = vsub.s32 0, %v1072
  %v1074 = vrot.slane %v1035, %v1073
  %v1075 = vlaneseq
  %v1076 = vshrl.u32 %v1075, 7
  %v1077 = vsub.s32 0, %v1076
  %v1078 = vrot.slane %v1036, %v1077
  %v1079 = vlaneseq
  %v1080 = vshrl.u32 %v1079, 7
  %v1081 = vsub.s32 0, %v1080
  %v1082 = vrot.slane %v1037, %v1081
  %v1083 = vlaneseq
  %v1084 = vshrl.u32 %v1083, 7
  %v1085 = vsub.s32 0, %v1084
  %v1086 = vrot.slane %v1038, %v1085
  %v1087 = vlaneseq
  %v1088 = vshrl.u32 %v1087, 7
  %v1089 = vsub.s32 0, %v1088
  %v1090 = vrot.slane %v1039, %v1089
  %v1091 = vlaneseq
  %v1092 = vshrl.u32 %v1091, 7
  %v1093 = vsub.s32 0, %v1092
  %v1094 = vrot.slane %v1040, %v1093
  %v1095 = vlaneseq
  %v1096 = vshrl.u32 %v1095, 7
  %v1097 = vsub.s32 0, %v1096
  %v1098 = vrot.slane %v1041, %v1097
  %v1099 = vlaneseq
  %v1100 = vshrl.u32 %v1099, 7
  %v1101 = vsub.s32 0, %v1100
  %v1102 = vrot.slane %v1042, %v1101
  %v1103 = vlaneseq
  %v1104 = vshrl.u32 %v1103, 7
  %v1105 = vsub.s32 0, %v1104
  %v1106 = vrot.slane %v1043, %v1105
  %v1107 = vlaneseq
  %v1108 = vshrl.u32 %v1107, 7
  %v1109 = vsub.s32 0, %v1108
  %v1110 = vrot.slane %v1044, %v1109
  %v1111 = vlaneseq
  %v1112 = vshrl.u32 %v1111, 7
  %v1113 = vsub.s32 0, %v1112
  %v1114 = vrot.slane %v1045, %v1113
  %v1115 = vlaneseq
  %v1116 = vshrl.u32 %v1115, 7
  %v1117 = vsub.s32 0, %v1116
  %v1118 = vrot.slane %v1046, %v1117
  %v1119 = vmul.f32 %v393, %v1050
  %v1120 = vmul.f32 %v394, %v1054
  %v1121 = vmul.f32 %v395, %v1058
  %v1122 = vmul.f32 %v396, %v1062
  %v1123 = vmul.f32 %v397, %v1066
  %v1124 = vmul.f32 %v398, %v1070
  %v1125 = vmul.f32 %v399, %v1074
  %v1126 = vmul.f32 %v400, %v1078
  %v1127 = vmul.f32 %v401, %v1082
  %v1128 = vmul.f32 %v402, %v1086
  %v1129 = vmul.f32 %v403, %v1090
  %v1130 = vmul.f32 %v404, %v1094
  %v1131 = vmul.f32 %v405, %v1098
  %v1132 = vmul.f32 %v406, %v1102
  %v1133 = vmul.f32 %v407, %v1106
  %v1134 = vmul.f32 %v408, %v1110
  %v1135 = vmul.f32 %v409, %v1114
  %v1136 = vmul.f32 %v410, %v1118
  %v1137 = vmul.f32 %v411, %v1050
  %v1138 = vmul.f32 %v412, %v1054
  %v1139 = vmul.f32 %v413, %v1058
  %v1140 = vmul.f32 %v414, %v1062
  %v1141 = vmul.f32 %v415, %v1066
  %v1142 = vmul.f32 %v416, %v1070
  %v1143 = vmul.f32 %v417, %v1074
  %v1144 = vmul.f32 %v418, %v1078
  %v1145 = vmul.f32 %v419, %v1082
  %v1146 = vmul.f32 %v420, %v1086
  %v1147 = vmul.f32 %v421, %v1090
  %v1148 = vmul.f32 %v422, %v1094
  %v1149 = vmul.f32 %v423, %v1098
  %v1150 = vmul.f32 %v424, %v1102
  %v1151 = vmul.f32 %v425, %v1106
  %v1152 = vmul.f32 %v426, %v1110
  %v1153 = vmul.f32 %v427, %v1114
  %v1154 = vmul.f32 %v428, %v1118
  %v1155 = vmul.f32 %v429, %v1050
  %v1156 = vmul.f32 %v430, %v1054
  %v1157 = vmul.f32 %v431, %v1058
  %v1158 = vmul.f32 %v432, %v1062
  %v1159 = vmul.f32 %v433, %v1066
  %v1160 = vmul.f32 %v434, %v1070
  %v1161 = vmul.f32 %v435, %v1074
  %v1162 = vmul.f32 %v436, %v1078
  %v1163 = vmul.f32 %v437, %v1082
  %v1164 = vmul.f32 %v438, %v1086
  %v1165 = vmul.f32 %v439, %v1090
  %v1166 = vmul.f32 %v440, %v1094
  %v1167 = vmul.f32 %v441, %v1098
  %v1168 = vmul.f32 %v442, %v1102
  %v1169 = vmul.f32 %v443, %v1106
  %v1170 = vmul.f32 %v444, %v1110
  %v1171 = vmul.f32 %v445, %v1114
  %v1172 = vmul.f32 %v446, %v1118
  %v1173 = vmul.f32 %v447, %v1050
  %v1174 = vmul.f32 %v448, %v1054
  %v1175 = vmul.f32 %v449, %v1058
  %v1176 = vmul.f32 %v450, %v1062
  %v1177 = vmul.f32 %v451, %v1066
  %v1178 = vmul.f32 %v452, %v1070
  %v1179 = vmul.f32 %v453, %v1074
  %v1180 = vmul.f32 %v454, %v1078
  %v1181 = vmul.f32 %v455, %v1082
  %v1182 = vmul.f32 %v456, %v1086
  %v1183 = vmul.f32 %v457, %v1090
  %v1184 = vmul.f32 %v458, %v1094
  %v1185 = vmul.f32 %v459, %v1098
  %v1186 = vmul.f32 %v460, %v1102
  %v1187 = vmul.f32 %v461, %v1106
  %v1188 = vmul.f32 %v462, %v1110
  %v1189 = vmul.f32 %v463, %v1114
  %v1190 = vmul.f32 %v464, %v1118
  %v1191 = vmul.f32 %v465, %v1050
  %v1192 = vmul.f32 %v466, %v1054
  %v1193 = vmul.f32 %v467, %v1058
  %v1194 = vmul.f32 %v468, %v1062
  %v1195 = vmul.f32 %v469, %v1066
  %v1196 = vmul.f32 %v470, %v1070
  %v1197 = vmul.f32 %v471, %v1074
  %v1198 = vmul.f32 %v472, %v1078
  %v1199 = vmul.f32 %v473, %v1082
  %v1200 = vmul.f32 %v474, %v1086
  %v1201 = vmul.f32 %v475, %v1090
  %v1202 = vmul.f32 %v476, %v1094
  %v1203 = vmul.f32 %v477, %v1098
  %v1204 = vmul.f32 %v478, %v1102
  %v1205 = vmul.f32 %v479, %v1106
  %v1206 = vmul.f32 %v480, %v1110
  %v1207 = vmul.f32 %v481, %v1114
  %v1208 = vmul.f32 %v482, %v1118
  %v1209 = vmul.f32 %v483, %v1050
  %v1210 = vmul.f32 %v484, %v1054
  %v1211 = vmul.f32 %v485, %v1058
  %v1212 = vmul.f32 %v486, %v1062
  %v1213 = vmul.f32 %v487, %v1066
  %v1214 = vmul.f32 %v488, %v1070
  %v1215 = vmul.f32 %v489, %v1074
  %v1216 = vmul.f32 %v490, %v1078
  %v1217 = vmul.f32 %v491, %v1082
  %v1218 = vmul.f32 %v492, %v1086
  %v1219 = vmul.f32 %v493, %v1090
  %v1220 = vmul.f32 %v494, %v1094
  %v1221 = vmul.f32 %v495, %v1098
  %v1222 = vmul.f32 %v496, %v1102
  %v1223 = vmul.f32 %v497, %v1106
  %v1224 = vmul.f32 %v498, %v1110
  %v1225 = vmul.f32 %v499, %v1114
  %v1226 = vmul.f32 %v500, %v1118
  %v1227 = vmul.f32 %v501, %v1050
  %v1228 = vmul.f32 %v502, %v1054
  %v1229 = vmul.f32 %v503, %v1058
  %v1230 = vmul.f32 %v504, %v1062
  %v1231 = vmul.f32 %v505, %v1066
  %v1232 = vmul.f32 %v506, %v1070
  %v1233 = vmul.f32 %v507, %v1074
  %v1234 = vmul.f32 %v508, %v1078
  %v1235 = vmul.f32 %v509, %v1082
  %v1236 = vmul.f32 %v510, %v1086
  %v1237 = vmul.f32 %v511, %v1090
  %v1238 = vmul.f32 %v512, %v1094
  %v1239 = vmul.f32 %v513, %v1098
  %v1240 = vmul.f32 %v514, %v1102
  %v1241 = vmul.f32 %v515, %v1106
  %v1242 = vmul.f32 %v516, %v1110
  %v1243 = vmul.f32 %v517, %v1114
  %v1244 = vmul.f32 %v518, %v1118
  %v1245 = vld [vmem:[%s2] sm:$0xff]
  %v1246 = vld [vmem:[%s2 + $0x8] sm:$0xff]
  %v1247 = vld [vmem:[%s2 + $0x10] sm:$0x3]
  %v1251 = vlaneseq
  %v1252 = vshrl.u32 %v1251, 7
  %v1253 = vsub.s32 0, %v1252
  %v1254 = vrot.slane %v1245, %v1253
  %v1255 = vlaneseq
  %v1256 = vshrl.u32 %v1255, 7
  %v1257 = vsub.s32 1, %v1256
  %v1258 = vrot.slane %v1245, %v1257
  %v1259 = vlaneseq
  %v1260 = vshrl.u32 %v1259, 7
  %v1261 = vsub.s32 2, %v1260
  %v1262 = vrot.slane %v1245, %v1261
  %v1263 = vlaneseq
  %v1264 = vshrl.u32 %v1263, 7
  %v1265 = vsub.s32 3, %v1264
  %v1266 = vrot.slane %v1245, %v1265
  %v1267 = vlaneseq
  %v1268 = vshrl.u32 %v1267, 7
  %v1269 = vsub.s32 4, %v1268
  %v1270 = vrot.slane %v1245, %v1269
  %v1271 = vlaneseq
  %v1272 = vshrl.u32 %v1271, 7
  %v1273 = vsub.s32 5, %v1272
  %v1274 = vrot.slane %v1245, %v1273
  %v1275 = vlaneseq
  %v1276 = vshrl.u32 %v1275, 7
  %v1277 = vsub.s32 6, %v1276
  %v1278 = vrot.slane %v1245, %v1277
  %v1279 = vlaneseq
  %v1280 = vshrl.u32 %v1279, 7
  %v1281 = vsub.s32 7, %v1280
  %v1282 = vrot.slane %v1245, %v1281
  %v1283 = vlaneseq
  %v1284 = vshrl.u32 %v1283, 7
  %v1285 = vsub.s32 0, %v1284
  %v1286 = vrot.slane %v1246, %v1285
  %v1287 = vlaneseq
  %v1288 = vshrl.u32 %v1287, 7
  %v1289 = vsub.s32 1, %v1288
  %v1290 = vrot.slane %v1246, %v1289
  %v1291 = vlaneseq
  %v1292 = vshrl.u32 %v1291, 7
  %v1293 = vsub.s32 2, %v1292
  %v1294 = vrot.slane %v1246, %v1293
  %v1295 = vlaneseq
  %v1296 = vshrl.u32 %v1295, 7
  %v1297 = vsub.s32 3, %v1296
  %v1298 = vrot.slane %v1246, %v1297
  %v1299 = vlaneseq
  %v1300 = vshrl.u32 %v1299, 7
  %v1301 = vsub.s32 4, %v1300
  %v1302 = vrot.slane %v1246, %v1301
  %v1303 = vlaneseq
  %v1304 = vshrl.u32 %v1303, 7
  %v1305 = vsub.s32 5, %v1304
  %v1306 = vrot.slane %v1246, %v1305
  %v1307 = vlaneseq
  %v1308 = vshrl.u32 %v1307, 7
  %v1309 = vsub.s32 6, %v1308
  %v1310 = vrot.slane %v1246, %v1309
  %v1311 = vlaneseq
  %v1312 = vshrl.u32 %v1311, 7
  %v1313 = vsub.s32 7, %v1312
  %v1314 = vrot.slane %v1246, %v1313
  %v1315 = vlaneseq
  %v1316 = vshrl.u32 %v1315, 7
  %v1317 = vsub.s32 0, %v1316
  %v1318 = vrot.slane %v1247, %v1317
  %v1319 = vlaneseq
  %v1320 = vshrl.u32 %v1319, 7
  %v1321 = vsub.s32 1, %v1320
  %v1322 = vrot.slane %v1247, %v1321
  %v1341 = vadd.f32 %v1119, %v1254
  %v1342 = vadd.f32 %v1120, %v1258
  %v1343 = vadd.f32 %v1121, %v1262
  %v1344 = vadd.f32 %v1122, %v1266
  %v1345 = vadd.f32 %v1123, %v1270
  %v1346 = vadd.f32 %v1124, %v1274
  %v1347 = vadd.f32 %v1125, %v1278
  %v1348 = vadd.f32 %v1126, %v1282
  %v1349 = vadd.f32 %v1127, %v1286
  %v1350 = vadd.f32 %v1128, %v1290
  %v1351 = vadd.f32 %v1129, %v1294
  %v1352 = vadd.f32 %v1130, %v1298
  %v1353 = vadd.f32 %v1131, %v1302
  %v1354 = vadd.f32 %v1132, %v1306
  %v1355 = vadd.f32 %v1133, %v1310
  %v1356 = vadd.f32 %v1134, %v1314
  %v1357 = vadd.f32 %v1135, %v1318
  %v1358 = vadd.f32 %v1136, %v1322
  %v1359 = vadd.f32 %v1137, %v1254
  %v1360 = vadd.f32 %v1138, %v1258
  %v1361 = vadd.f32 %v1139, %v1262
  %v1362 = vadd.f32 %v1140, %v1266
  %v1363 = vadd.f32 %v1141, %v1270
  %v1364 = vadd.f32 %v1142, %v1274
  %v1365 = vadd.f32 %v1143, %v1278
  %v1366 = vadd.f32 %v1144, %v1282
  %v1367 = vadd.f32 %v1145, %v1286
  %v1368 = vadd.f32 %v1146, %v1290
  %v1369 = vadd.f32 %v1147, %v1294
  %v1370 = vadd.f32 %v1148, %v1298
  %v1371 = vadd.f32 %v1149, %v1302
  %v1372 = vadd.f32 %v1150, %v1306
  %v1373 = vadd.f32 %v1151, %v1310
  %v1374 = vadd.f32 %v1152, %v1314
  %v1375 = vadd.f32 %v1153, %v1318
  %v1376 = vadd.f32 %v1154, %v1322
  %v1377 = vadd.f32 %v1155, %v1254
  %v1378 = vadd.f32 %v1156, %v1258
  %v1379 = vadd.f32 %v1157, %v1262
  %v1380 = vadd.f32 %v1158, %v1266
  %v1381 = vadd.f32 %v1159, %v1270
  %v1382 = vadd.f32 %v1160, %v1274
  %v1383 = vadd.f32 %v1161, %v1278
  %v1384 = vadd.f32 %v1162, %v1282
  %v1385 = vadd.f32 %v1163, %v1286
  %v1386 = vadd.f32 %v1164, %v1290
  %v1387 = vadd.f32 %v1165, %v1294
  %v1388 = vadd.f32 %v1166, %v1298
  %v1389 = vadd.f32 %v1167, %v1302
  %v1390 = vadd.f32 %v1168, %v1306
  %v1391 = vadd.f32 %v1169, %v1310
  %v1392 = vadd.f32 %v1170, %v1314
  %v1393 = vadd.f32 %v1171, %v1318
  %v1394 = vadd.f32 %v1172, %v1322
  %v1395 = vadd.f32 %v1173, %v1254
  %v1396 = vadd.f32 %v1174, %v1258
  %v1397 = vadd.f32 %v1175, %v1262
  %v1398 = vadd.f32 %v1176, %v1266
  %v1399 = vadd.f32 %v1177, %v1270
  %v1400 = vadd.f32 %v1178, %v1274
  %v1401 = vadd.f32 %v1179, %v1278
  %v1402 = vadd.f32 %v1180, %v1282
  %v1403 = vadd.f32 %v1181, %v1286
  %v1404 = vadd.f32 %v1182, %v1290
  %v1405 = vadd.f32 %v1183, %v1294
  %v1406 = vadd.f32 %v1184, %v1298
  %v1407 = vadd.f32 %v1185, %v1302
  %v1408 = vadd.f32 %v1186, %v1306
  %v1409 = vadd.f32 %v1187, %v1310
  %v1410 = vadd.f32 %v1188, %v1314
  %v1411 = vadd.f32 %v1189, %v1318
  %v1412 = vadd.f32 %v1190, %v1322
  %v1413 = vadd.f32 %v1191, %v1254
  %v1414 = vadd.f32 %v1192, %v1258
  %v1415 = vadd.f32 %v1193, %v1262
  %v1416 = vadd.f32 %v1194, %v1266
  %v1417 = vadd.f32 %v1195, %v1270
  %v1418 = vadd.f32 %v1196, %v1274
  %v1419 = vadd.f32 %v1197, %v1278
  %v1420 = vadd.f32 %v1198, %v1282
  %v1421 = vadd.f32 %v1199, %v1286
  %v1422 = vadd.f32 %v1200, %v1290
  %v1423 = vadd.f32 %v1201, %v1294
  %v1424 = vadd.f32 %v1202, %v1298
  %v1425 = vadd.f32 %v1203, %v1302
  %v1426 = vadd.f32 %v1204, %v1306
  %v1427 = vadd.f32 %v1205, %v1310
  %v1428 = vadd.f32 %v1206, %v1314
  %v1429 = vadd.f32 %v1207, %v1318
  %v1430 = vadd.f32 %v1208, %v1322
  %v1431 = vadd.f32 %v1209, %v1254
  %v1432 = vadd.f32 %v1210, %v1258
  %v1433 = vadd.f32 %v1211, %v1262
  %v1434 = vadd.f32 %v1212, %v1266
  %v1435 = vadd.f32 %v1213, %v1270
  %v1436 = vadd.f32 %v1214, %v1274
  %v1437 = vadd.f32 %v1215, %v1278
  %v1438 = vadd.f32 %v1216, %v1282
  %v1439 = vadd.f32 %v1217, %v1286
  %v1440 = vadd.f32 %v1218, %v1290
  %v1441 = vadd.f32 %v1219, %v1294
  %v1442 = vadd.f32 %v1220, %v1298
  %v1443 = vadd.f32 %v1221, %v1302
  %v1444 = vadd.f32 %v1222, %v1306
  %v1445 = vadd.f32 %v1223, %v1310
  %v1446 = vadd.f32 %v1224, %v1314
  %v1447 = vadd.f32 %v1225, %v1318
  %v1448 = vadd.f32 %v1226, %v1322
  %v1449 = vadd.f32 %v1227, %v1254
  %v1450 = vadd.f32 %v1228, %v1258
  %v1451 = vadd.f32 %v1229, %v1262
  %v1452 = vadd.f32 %v1230, %v1266
  %v1453 = vadd.f32 %v1231, %v1270
  %v1454 = vadd.f32 %v1232, %v1274
  %v1455 = vadd.f32 %v1233, %v1278
  %v1456 = vadd.f32 %v1234, %v1282
  %v1457 = vadd.f32 %v1235, %v1286
  %v1458 = vadd.f32 %v1236, %v1290
  %v1459 = vadd.f32 %v1237, %v1294
  %v1460 = vadd.f32 %v1238, %v1298
  %v1461 = vadd.f32 %v1239, %v1302
  %v1462 = vadd.f32 %v1240, %v1306
  %v1463 = vadd.f32 %v1241, %v1310
  %v1464 = vadd.f32 %v1242, %v1314
  %v1465 = vadd.f32 %v1243, %v1318
  %v1466 = vadd.f32 %v1244, %v1322
  %1467 = vst [vmem:[%s3] sm:$0xff] %v1341
  %1468 = vst [vmem:[%s3 + $0x8] sm:$0xff] %v1342
  %1469 = vst [vmem:[%s3 + $0x10] sm:$0xff] %v1343
  %1470 = vst [vmem:[%s3 + $0x18] sm:$0xff] %v1344
  %1471 = vst [vmem:[%s3 + $0x20] sm:$0xff] %v1345
  %1472 = vst [vmem:[%s3 + $0x28] sm:$0xff] %v1346
  %1473 = vst [vmem:[%s3 + $0x30] sm:$0xff] %v1347
  %1474 = vst [vmem:[%s3 + $0x38] sm:$0xff] %v1348
  %1475 = vst [vmem:[%s3 + $0x40] sm:$0xff] %v1349
  %1476 = vst [vmem:[%s3 + $0x48] sm:$0xff] %v1350
  %1477 = vst [vmem:[%s3 + $0x50] sm:$0xff] %v1351
  %1478 = vst [vmem:[%s3 + $0x58] sm:$0xff] %v1352
  %1479 = vst [vmem:[%s3 + $0x60] sm:$0xff] %v1353
  %1480 = vst [vmem:[%s3 + $0x68] sm:$0xff] %v1354
  %1481 = vst [vmem:[%s3 + $0x70] sm:$0xff] %v1355
  %1482 = vst [vmem:[%s3 + $0x78] sm:$0xff] %v1356
  %1483 = vst [vmem:[%s3 + $0x80] sm:$0xff] %v1357
  %1484 = vst [vmem:[%s3 + $0x88] sm:$0xff] %v1358
  %1485 = vst [vmem:[%s3 + $0x90] sm:$0xff] %v1359
  %1486 = vst [vmem:[%s3 + $0x98] sm:$0xff] %v1360
  %1487 = vst [vmem:[%s3 + $0xa0] sm:$0xff] %v1361
  %1488 = vst [vmem:[%s3 + $0xa8] sm:$0xff] %v1362
  %1489 = vst [vmem:[%s3 + $0xb0] sm:$0xff] %v1363
  %1490 = vst [vmem:[%s3 + $0xb8] sm:$0xff] %v1364
  %1491 = vst [vmem:[%s3 + $0xc0] sm:$0xff] %v1365
  %1492 = vst [vmem:[%s3 + $0xc8] sm:$0xff] %v1366
  %1493 = vst [vmem:[%s3 + $0xd0] sm:$0xff] %v1367
  %1494 = vst [vmem:[%s3 + $0xd8] sm:$0xff] %v1368
  %1495 = vst [vmem:[%s3 + $0xe0] sm:$0xff] %v1369
  %1496 = vst [vmem:[%s3 + $0xe8] sm:$0xff] %v1370
  %1497 = vst [vmem:[%s3 + $0xf0] sm:$0xff] %v1371
  %1498 = vst [vmem:[%s3 + $0xf8] sm:$0xff] %v1372
  %1499 = vst [vmem:[%s3 + $0x100] sm:$0xff] %v1373
  %1500 = vst [vmem:[%s3 + $0x108] sm:$0xff] %v1374
  %1501 = vst [vmem:[%s3 + $0x110] sm:$0xff] %v1375
  %1502 = vst [vmem:[%s3 + $0x118] sm:$0xff] %v1376
  %1503 = vst [vmem:[%s3 + $0x120] sm:$0xff] %v1377
  %1504 = vst [vmem:[%s3 + $0x128] sm:$0xff] %v1378
  %1505 = vst [vmem:[%s3 + $0x130] sm:$0xff] %v1379
  %1506 = vst [vmem:[%s3 + $0x138] sm:$0xff] %v1380
  %1507 = vst [vmem:[%s3 + $0x140] sm:$0xff] %v1381
  %1508 = vst [vmem:[%s3 + $0x148] sm:$0xff] %v1382
  %1509 = vst [vmem:[%s3 + $0x150] sm:$0xff] %v1383
  %1510 = vst [vmem:[%s3 + $0x158] sm:$0xff] %v1384
  %1511 = vst [vmem:[%s3 + $0x160] sm:$0xff] %v1385
  %1512 = vst [vmem:[%s3 + $0x168] sm:$0xff] %v1386
  %1513 = vst [vmem:[%s3 + $0x170] sm:$0xff] %v1387
  %1514 = vst [vmem:[%s3 + $0x178] sm:$0xff] %v1388
  %1515 = vst [vmem:[%s3 + $0x180] sm:$0xff] %v1389
  %1516 = vst [vmem:[%s3 + $0x188] sm:$0xff] %v1390
  %1517 = vst [vmem:[%s3 + $0x190] sm:$0xff] %v1391
  %1518 = vst [vmem:[%s3 + $0x198] sm:$0xff] %v1392
  %1519 = vst [vmem:[%s3 + $0x1a0] sm:$0xff] %v1393
  %1520 = vst [vmem:[%s3 + $0x1a8] sm:$0xff] %v1394
  %1521 = vst [vmem:[%s3 + $0x1b0] sm:$0xff] %v1395
  %1522 = vst [vmem:[%s3 + $0x1b8] sm:$0xff] %v1396
  %1523 = vst [vmem:[%s3 + $0x1c0] sm:$0xff] %v1397
  %1524 = vst [vmem:[%s3 + $0x1c8] sm:$0xff] %v1398
  %1525 = vst [vmem:[%s3 + $0x1d0] sm:$0xff] %v1399
  %1526 = vst [vmem:[%s3 + $0x1d8] sm:$0xff] %v1400
  %1527 = vst [vmem:[%s3 + $0x1e0] sm:$0xff] %v1401
  %1528 = vst [vmem:[%s3 + $0x1e8] sm:$0xff] %v1402
  %1529 = vst [vmem:[%s3 + $0x1f0] sm:$0xff] %v1403
  %1530 = vst [vmem:[%s3 + $0x1f8] sm:$0xff] %v1404
  %1531 = vst [vmem:[%s3 + $0x200] sm:$0xff] %v1405
  %1532 = vst [vmem:[%s3 + $0x208] sm:$0xff] %v1406
  %1533 = vst [vmem:[%s3 + $0x210] sm:$0xff] %v1407
  %1534 = vst [vmem:[%s3 + $0x218] sm:$0xff] %v1408
  %1535 = vst [vmem:[%s3 + $0x220] sm:$0xff] %v1409
  %1536 = vst [vmem:[%s3 + $0x228] sm:$0xff] %v1410
  %1537 = vst [vmem:[%s3 + $0x230] sm:$0xff] %v1411
  %1538 = vst [vmem:[%s3 + $0x238] sm:$0xff] %v1412
  %1539 = vst [vmem:[%s3 + $0x240] sm:$0xff] %v1413
  %1540 = vst [vmem:[%s3 + $0x248] sm:$0xff] %v1414
  %1541 = vst [vmem:[%s3 + $0x250] sm:$0xff] %v1415
  %1542 = vst [vmem:[%s3 + $0x258] sm:$0xff] %v1416
  %1543 = vst [vmem:[%s3 + $0x260] sm:$0xff] %v1417
  %1544 = vst [vmem:[%s3 + $0x268] sm:$0xff] %v1418
  %1545 = vst [vmem:[%s3 + $0x270] sm:$0xff] %v1419
  %1546 = vst [vmem:[%s3 + $0x278] sm:$0xff] %v1420
  %1547 = vst [vmem:[%s3 + $0x280] sm:$0xff] %v1421
  %1548 = vst [vmem:[%s3 + $0x288] sm:$0xff] %v1422
  %1549 = vst [vmem:[%s3 + $0x290] sm:$0xff] %v1423
  %1550 = vst [vmem:[%s3 + $0x298] sm:$0xff] %v1424
  %1551 = vst [vmem:[%s3 + $0x2a0] sm:$0xff] %v1425
  %1552 = vst [vmem:[%s3 + $0x2a8] sm:$0xff] %v1426
  %1553 = vst [vmem:[%s3 + $0x2b0] sm:$0xff] %v1427
  %1554 = vst [vmem:[%s3 + $0x2b8] sm:$0xff] %v1428
  %1555 = vst [vmem:[%s3 + $0x2c0] sm:$0xff] %v1429
  %1556 = vst [vmem:[%s3 + $0x2c8] sm:$0xff] %v1430
  %1557 = vst [vmem:[%s3 + $0x2d0] sm:$0xff] %v1431
  %1558 = vst [vmem:[%s3 + $0x2d8] sm:$0xff] %v1432
  %1559 = vst [vmem:[%s3 + $0x2e0] sm:$0xff] %v1433
  %1560 = vst [vmem:[%s3 + $0x2e8] sm:$0xff] %v1434
  %1561 = vst [vmem:[%s3 + $0x2f0] sm:$0xff] %v1435
  %1562 = vst [vmem:[%s3 + $0x2f8] sm:$0xff] %v1436
  %1563 = vst [vmem:[%s3 + $0x300] sm:$0xff] %v1437
  %1564 = vst [vmem:[%s3 + $0x308] sm:$0xff] %v1438
  %1565 = vst [vmem:[%s3 + $0x310] sm:$0xff] %v1439
  %1566 = vst [vmem:[%s3 + $0x318] sm:$0xff] %v1440
  %1567 = vst [vmem:[%s3 + $0x320] sm:$0xff] %v1441
  %1568 = vst [vmem:[%s3 + $0x328] sm:$0xff] %v1442
  %1569 = vst [vmem:[%s3 + $0x330] sm:$0xff] %v1443
  %1570 = vst [vmem:[%s3 + $0x338] sm:$0xff] %v1444
  %1571 = vst [vmem:[%s3 + $0x340] sm:$0xff] %v1445
  %1572 = vst [vmem:[%s3 + $0x348] sm:$0xff] %v1446
  %1573 = vst [vmem:[%s3 + $0x350] sm:$0xff] %v1447
  %1574 = vst [vmem:[%s3 + $0x358] sm:$0xff] %v1448
  %1575 = vst [vmem:[%s3 + $0x360] sm:$0x1] %v1449
  %1576 = vst [vmem:[%s3 + $0x368] sm:$0x1] %v1450
  %1577 = vst [vmem:[%s3 + $0x370] sm:$0x1] %v1451
  %1578 = vst [vmem:[%s3 + $0x378] sm:$0x1] %v1452
  %1579 = vst [vmem:[%s3 + $0x380] sm:$0x1] %v1453
  %1580 = vst [vmem:[%s3 + $0x388] sm:$0x1] %v1454
  %1581 = vst [vmem:[%s3 + $0x390] sm:$0x1] %v1455
  %1582 = vst [vmem:[%s3 + $0x398] sm:$0x1] %v1456
  %1583 = vst [vmem:[%s3 + $0x3a0] sm:$0x1] %v1457
  %1584 = vst [vmem:[%s3 + $0x3a8] sm:$0x1] %v1458
  %1585 = vst [vmem:[%s3 + $0x3b0] sm:$0x1] %v1459
  %1586 = vst [vmem:[%s3 + $0x3b8] sm:$0x1] %v1460
  %1587 = vst [vmem:[%s3 + $0x3c0] sm:$0x1] %v1461
  %1588 = vst [vmem:[%s3 + $0x3c8] sm:$0x1] %v1462
  %1589 = vst [vmem:[%s3 + $0x3d0] sm:$0x1] %v1463
  %1590 = vst [vmem:[%s3 + $0x3d8] sm:$0x1] %v1464
  %1591 = vst [vmem:[%s3 + $0x3e0] sm:$0x1] %v1465
  %1592 = vst [vmem:[%s3 + $0x3e8] sm:$0x1] %v1466
  // Predicated region
  $region14: #{batchnorm2d_pallas.1} parent=0 // pred_check
    _
  $region15: #{batchnorm2d_pallas.1} parent=0 // pred_check_branch
    %1594 = sbr.rel (0) target = $region17
  $region16: #{batchnorm2d_pallas.1} parent=0 // pred_region
    _
  $region17: #{batchnorm2d_pallas.1} parent=0 // pred_fallthru
    _
  // Predicated region
  $region18: #{batchnorm2d_pallas.1} parent=0 // pred_check
    _
  $region19: #{batchnorm2d_pallas.1} parent=0 // pred_check_branch
    %1596 = sbr.rel (0) target = $region21
  $region20: #{batchnorm2d_pallas.1} parent=0 // pred_region
    _
  $region21: #{batchnorm2d_pallas.1} parent=0 // pred_fallthru
    _

</llo_original>
